<compile_context>
chip_gen: v7x
topology: tpu7x:2x2x1
jax: 0.10.0
libtpu: 0.0.40
codegen_flags: <defaults>
</compile_context>

<pallas_src>
import numpy as np
import jax
import jax.numpy as jnp
from jax.experimental import pallas as pl
from jax.experimental.pallas import tpu as pltpu


def _rfno_kernel(x_ref, w0_ref, rt_ref, rb_ref, er_ref, ei_ref,
                 wcr_ref, wci_ref, fr_ref, fi_ref, o_ref):
    f32 = jnp.float32
    bf16 = jnp.bfloat16

    # (1) weights0 hoist (DFT is linear), fused with batch folding:
    #     rows 0..Bt-1  of y : Re(sum_c w0[c] * x[b, c, :])
    #     rows Bt..2Bt-1 of y : Im(sum_c w0[c] * x[b, c, :])
    y = jnp.dot(w0_ref[...], x_ref[...].astype(bf16),
                preferred_element_type=f32)                      # (2*Bt, HW)

    # (2) truncated forward 2-D DFT over the kept (lane-padded) modes.
    yb = y.astype(bf16)
    ar = jnp.dot(yb, er_ref[...], preferred_element_type=f32)    # (2*Bt, JKp)
    ai = jnp.dot(yb, ei_ref[...], preferred_element_type=f32)

    # (3) complex recombination + O-fold row replication with 0/1 selector
    #     matmuls (keeps every op 2-D: no sublane slicing / reshape / repeat).
    arb = ar.astype(bf16)
    aib = ai.astype(bf16)
    rt = rt_ref[...]
    rb = rb_ref[...]
    s_re = (jnp.dot(rt, arb, preferred_element_type=f32)
            - jnp.dot(rb, aib, preferred_element_type=f32))      # (Bt*O, JKp)
    s_im = (jnp.dot(rt, aib, preferred_element_type=f32)
            + jnp.dot(rb, arb, preferred_element_type=f32))

    # (4) per-output-channel complex mode mixing (VPU, lane-dense JKp).
    wcr = wcr_ref[...]
    wci = wci_ref[...]
    oft_re = s_re * wcr - s_im * wci
    oft_im = s_re * wci + s_im * wcr

    # (5) truncated inverse transform; Re(.) selection, Hermitian doubling and
    #     the 1/(H*W) normalisation are folded into F.
    o_ref[...] = (jnp.dot(oft_re.astype(bf16), fr_ref[...],
                          preferred_element_type=f32)
                  - jnp.dot(oft_im.astype(bf16), fi_ref[...],
                            preferred_element_type=f32))         # (Bt*O, HW)


def _pick_block_batch(B, C):
    """Batches per grid step (fold batch into the matmul M dimension).

    Preference order: sublane-aligned blocks (Bt*C % 8 == 0, so the x / out
    BlockSpecs satisfy the (8, 128) rule without the full-array escape hatch),
    keep >= 2 grid steps (v7x has 2 TensorCores sharing a parallel grid axis),
    then the largest Bt (bigger MXU M, fewer per-step overheads).  Falls back
    to Bt == B (block == full array, always legal).
    """
    divisors = [d for d in range(1, B + 1) if B % d == 0]
    aligned = [d for d in divisors if (d * C) % 8 == 0 and d * C <= 256]
    if not aligned:
        return B
    multi = [d for d in aligned if B // d >= 2]
    return max(multi) if multi else max(aligned)


def rfno_forward(x, weights0, weights1, weights2, modes1, modes2):
    B, C, H, W = x.shape
    O = weights1.shape[1]
    assert C == O, "weights0 broadcast requires in_channels == out_channels"
    assert 2 * modes1 <= H and modes2 <= W // 2 + 1
    J, K = 2 * modes1, modes2
    HW, JK = H * W, J * K
    JKp = ((JK + 127) // 128) * 128          # lane-dense mode dimension
    Bt = _pick_block_batch(B, C)
    nb = B // Bt

    f32, bf16 = jnp.float32, jnp.bfloat16

    # ---- host-side glue: DFT bases & parameter repacking --------------------
    kx = jnp.concatenate([jnp.arange(modes1), jnp.arange(H - modes1, H)]
                         ).astype(jnp.int32)                       # (J,)
    ky = jnp.arange(modes2, dtype=jnp.int32)                       # (K,)
    hh = jnp.arange(H, dtype=jnp.int32)
    ww = jnp.arange(W, dtype=jnp.int32)
    # exact integer (k*n mod N) phases -> no ULP loss for large grids
    thx = ((kx[:, None] * hh[None, :]) % H).astype(f32) * (2.0 * np.pi / H)
    thy = ((ky[:, None] * ww[None, :]) % W).astype(f32) * (2.0 * np.pi / W)
    ex = jnp.exp(-1j * thx)                  # (J, H)
    ey = jnp.exp(-1j * thy)                  # (K, W)

    # forward basis E[(h,w),(j,k)] = exp(-2i*pi*(kx_j*h/H + ky_k*w/W))
    E = (ex.T[:, None, :, None] * ey.T[None, :, None, :]).reshape(HW, JK)
    # inverse basis: Hermitian doubling (2 for 0 < ky < W/2, else 1) and the
    # 1/(H*W) backward norm folded in; only the real part survives irfft2.
    ck = jnp.where((ky == 0) | ((W % 2 == 0) & (ky == W // 2)),
                   1.0, 2.0).astype(f32)
    F = (ck[None, :, None, None] * jnp.conj(ex)[:, None, :, None]
         * jnp.conj(ey)[None, :, None, :] / (H * W)).reshape(JK, HW)

    padc = [(0, 0), (0, JKp - JK)]
    padr = [(0, JKp - JK), (0, 0)]
    er = jnp.pad(jnp.real(E), padc).astype(bf16)          # (HW, JKp)
    ei = jnp.pad(jnp.imag(E), padc).astype(bf16)
    fr = jnp.pad(jnp.real(F), padr).astype(bf16)          # (JKp, HW)
    fi = jnp.pad(jnp.imag(F), padr).astype(bf16)

    # per-output-channel mode weights (weights1 rows on top of weights2 rows),
    # lane-padded and pre-tiled to the (Bt*O, JKp) block row layout m = b*O+o.
    wc = jnp.concatenate([weights1[0], weights2[0]], axis=1).reshape(O, JK)
    wcr = jnp.tile(jnp.pad(jnp.real(wc), padc), (Bt, 1)).astype(f32)
    wci = jnp.tile(jnp.pad(jnp.imag(wc), padc), (Bt, 1)).astype(f32)

    # weights0-hoist operator, block-diagonal over the Bt batches of a block:
    # W0big[r*Bt + b, b*C + c] = Re/Im(weights0[c])   (r = 0: Re, r = 1: Im)
    w0 = weights0.reshape(O)
    w0ri = jnp.stack([jnp.real(w0), jnp.imag(w0)], axis=0).astype(f32)  # (2, C)
    eyeb = jnp.eye(Bt, dtype=f32)
    w0big = (w0ri[:, None, None, :] * eyeb[None, :, :, None]
             ).reshape(2 * Bt, Bt * C).astype(bf16)

    # 0/1 selectors: row m = b*O + o of (Rt @ A) picks A[b]; (Rb @ A) picks A[Bt+b].
    rows_b = jnp.arange(Bt * O) // O
    cols = jnp.arange(2 * Bt)
    rtop = (cols[None, :] == rows_b[:, None]).astype(bf16)       # (Bt*O, 2*Bt)
    rbot = (cols[None, :] == rows_b[:, None] + Bt).astype(bf16)

    x2 = x.reshape(B * C, HW).astype(f32)
    const_args = (w0big, rtop, rbot, er, ei, wcr, wci, fr, fi)

    # scoped-VMEM budget: default is only 16 MiB (v5e) / 32 MiB (v6e); raise it
    # but stay <= v7x's 64 MiB physical VMEM.
    blk_bytes = 4 * HW * (Bt * C + Bt * O)                      # x + out blocks
    const_bytes = sum(int(a.size) * a.dtype.itemsize for a in const_args)
    vmem_limit = int(min(max(2 * blk_bytes + 2 * const_bytes + (4 << 20),
                             32 << 20), 64 << 20))

    def build(single_buffer_consts):
        def cspec(shape):
            if single_buffer_consts:
                return pl.BlockSpec(shape, lambda i: (0, 0),
                                    pipeline_mode=pl.Buffered(1))
            return pl.BlockSpec(shape, lambda i: (0, 0))
        return pl.pallas_call(
            _rfno_kernel,
            out_shape=jax.ShapeDtypeStruct((B * O, HW), f32),
            grid=(nb,),
            in_specs=[pl.BlockSpec((Bt * C, HW), lambda i: (i, 0))]
                     + [cspec(a.shape) for a in const_args],
            out_specs=pl.BlockSpec((Bt * O, HW), lambda i: (i, 0)),
            compiler_params=pltpu.CompilerParams(
                dimension_semantics=("parallel",),
                vmem_limit_bytes=vmem_limit),
        )

    try:
        out = build(True)(x2, *const_args)
        out = jax.block_until_ready(out)
    except Exception:
        # pl.Buffered(1) single-buffering of the grid-invariant constants is a
        # pure VMEM optimisation; fall back to default double-buffering if this
        # JAX build rejects pipeline_mode.
        out = build(False)(x2, *const_args)

    return out.reshape(B, O, H, W)


def rfno_reference(x, weights0, weights1, weights2, modes1, modes2):
    """Pure-JAX replica of the PyTorch forward (for verification)."""
    B, C, H, W = x.shape
    x_ft = jnp.fft.rfft2(x)                       # (B, C, H, W//2+1)
    x_ft = x_ft * weights0                        # (1, O, 1, 1) broadcast
    top = jnp.sum(x_ft[:, :, :modes1, :modes2], axis=1, keepdims=True) * weights1
    bot = jnp.sum(x_ft[:, :, H - modes1:, :modes2], axis=1, keepdims=True) * weights2
    out_ft = jnp.zeros((B, weights1.shape[1], H, W // 2 + 1), dtype=jnp.complex64)
    out_ft = out_ft.at[:, :, :modes1, :modes2].set(top)
    out_ft = out_ft.at[:, :, H - modes1:, :modes2].set(bot)
    return jnp.fft.irfft2(out_ft, s=(H, W))


if __name__ == "__main__":
    B, C, H, W = 2, 4, 16, 16
    out_channels, modes1, modes2 = 4, 4, 4

    key = jax.random.PRNGKey(0)
    kx_, k0r, k0i, k1r, k1i, k2r, k2i = jax.random.split(key, 7)
    scale = 1.0 / out_channels

    def crand(kr, ki, shape):
        return (scale * (jax.random.uniform(kr, shape)
                         + 1j * jax.random.uniform(ki, shape))).astype(jnp.complex64)

    weights0 = crand(k0r, k0i, (1, out_channels, 1, 1))
    weights1 = crand(k1r, k1i, (1, out_channels, modes1, modes2))
    weights2 = crand(k2r, k2i, (1, out_channels, modes1, modes2))
    x = jax.random.uniform(kx_, (B, C, H, W), dtype=jnp.float32)

    out = rfno_forward(x, weights0, weights1, weights2, modes1, modes2)
    out = jax.block_until_ready(out)

    ref = rfno_reference(x, weights0, weights1, weights2, modes1, modes2)
    # bf16 MXU operands with f32 accumulation: observed error ~1e-3-level abs.
    np.testing.assert_allclose(np.asarray(out), np.asarray(ref),
                               rtol=1e-2, atol=1e-2)
    print("KERNEL_OK")
</pallas_src>

<mosaic_0001>
module attributes {stable_mosaic.version = 11 : i64} {
  func.func @_rfno_kernel(%arg0: i32, %arg1: memref<8x256xf32, #tpu.memory_space<vmem>>, %arg2: memref<4x8xbf16, #tpu.memory_space<vmem>>, %arg3: memref<8x4xbf16, #tpu.memory_space<vmem>>, %arg4: memref<8x4xbf16, #tpu.memory_space<vmem>>, %arg5: memref<256x128xbf16, #tpu.memory_space<vmem>>, %arg6: memref<256x128xbf16, #tpu.memory_space<vmem>>, %arg7: memref<8x128xf32, #tpu.memory_space<vmem>>, %arg8: memref<8x128xf32, #tpu.memory_space<vmem>>, %arg9: memref<128x256xbf16, #tpu.memory_space<vmem>>, %arg10: memref<128x256xbf16, #tpu.memory_space<vmem>>, %arg11: memref<8x256xf32, #tpu.memory_space<vmem>>) attributes {dimension_semantics = [#tpu.dimension_semantics<parallel>], iteration_bounds = array<i64: 1>, scalar_prefetch = 0 : i64, scratch_operands = 0 : i64, tpu.core_type = #tpu.core_type<tc>, window_params = [{transform_indices = @transform_0, window_bounds = array<i64: 8, 256>}, {pipeline_mode = #tpu.pipeline_mode<synchronous>, transform_indices = @transform_1, window_bounds = array<i64: 4, 8>}, {pipeline_mode = #tpu.pipeline_mode<synchronous>, transform_indices = @transform_2, window_bounds = array<i64: 8, 4>}, {pipeline_mode = #tpu.pipeline_mode<synchronous>, transform_indices = @transform_3, window_bounds = array<i64: 8, 4>}, {pipeline_mode = #tpu.pipeline_mode<synchronous>, transform_indices = @transform_4, window_bounds = array<i64: 256, 128>}, {pipeline_mode = #tpu.pipeline_mode<synchronous>, transform_indices = @transform_5, window_bounds = array<i64: 256, 128>}, {pipeline_mode = #tpu.pipeline_mode<synchronous>, transform_indices = @transform_6, window_bounds = array<i64: 8, 128>}, {pipeline_mode = #tpu.pipeline_mode<synchronous>, transform_indices = @transform_7, window_bounds = array<i64: 8, 128>}, {pipeline_mode = #tpu.pipeline_mode<synchronous>, transform_indices = @transform_8, window_bounds = array<i64: 128, 256>}, {pipeline_mode = #tpu.pipeline_mode<synchronous>, transform_indices = @transform_9, window_bounds = array<i64: 128, 256>}, {transform_indices = @transform_10, window_bounds = array<i64: 8, 256>}]} {
    %c0 = arith.constant 0 : index
    %c0_0 = arith.constant 0 : index
    %0 = vector.load %arg2[%c0, %c0_0] : memref<4x8xbf16, #tpu.memory_space<vmem>>, vector<4x8xbf16>
    %c0_1 = arith.constant 0 : index
    %c0_2 = arith.constant 0 : index
    %1 = vector.load %arg1[%c0_1, %c0_2] : memref<8x256xf32, #tpu.memory_space<vmem>>, vector<8x256xf32>
    %2 = arith.truncf %1 : vector<8x256xf32> to vector<8x256xbf16>
    %cst = arith.constant dense<0.000000e+00> : vector<4x256xf32>
    %3 = tpu.matmul %0, %2, %cst {dimension_numbers = #tpu.dot_dimension_numbers<[1], [0], [0], [1], [0, 0, 1, 1], [], []>} : vector<4x8xbf16>, vector<8x256xbf16>, vector<4x256xf32> -> vector<4x256xf32>
    %4 = arith.truncf %3 : vector<4x256xf32> to vector<4x256xbf16>
    %c0_3 = arith.constant 0 : index
    %c0_4 = arith.constant 0 : index
    %5 = vector.load %arg5[%c0_3, %c0_4] : memref<256x128xbf16, #tpu.memory_space<vmem>>, vector<256x128xbf16>
    %cst_5 = arith.constant dense<0.000000e+00> : vector<4x128xf32>
    %6 = tpu.matmul %4, %5, %cst_5 {dimension_numbers = #tpu.dot_dimension_numbers<[1], [0], [0], [1], [0, 0, 1, 1], [], []>} : vector<4x256xbf16>, vector<256x128xbf16>, vector<4x128xf32> -> vector<4x128xf32>
    %c0_6 = arith.constant 0 : index
    %c0_7 = arith.constant 0 : index
    %7 = vector.load %arg6[%c0_6, %c0_7] : memref<256x128xbf16, #tpu.memory_space<vmem>>, vector<256x128xbf16>
    %cst_8 = arith.constant dense<0.000000e+00> : vector<4x128xf32>
    %8 = tpu.matmul %4, %7, %cst_8 {dimension_numbers = #tpu.dot_dimension_numbers<[1], [0], [0], [1], [0, 0, 1, 1], [], []>} : vector<4x256xbf16>, vector<256x128xbf16>, vector<4x128xf32> -> vector<4x128xf32>
    %9 = arith.truncf %6 : vector<4x128xf32> to vector<4x128xbf16>
    %10 = arith.truncf %8 : vector<4x128xf32> to vector<4x128xbf16>
    %c0_9 = arith.constant 0 : index
    %c0_10 = arith.constant 0 : index
    %11 = vector.load %arg3[%c0_9, %c0_10] : memref<8x4xbf16, #tpu.memory_space<vmem>>, vector<8x4xbf16>
    %c0_11 = arith.constant 0 : index
    %c0_12 = arith.constant 0 : index
    %12 = vector.load %arg4[%c0_11, %c0_12] : memref<8x4xbf16, #tpu.memory_space<vmem>>, vector<8x4xbf16>
    %cst_13 = arith.constant dense<0.000000e+00> : vector<8x128xf32>
    %13 = tpu.matmul %11, %9, %cst_13 {dimension_numbers = #tpu.dot_dimension_numbers<[1], [0], [0], [1], [0, 0, 1, 1], [], []>} : vector<8x4xbf16>, vector<4x128xbf16>, vector<8x128xf32> -> vector<8x128xf32>
    %cst_14 = arith.constant dense<0.000000e+00> : vector<8x128xf32>
    %14 = tpu.matmul %12, %10, %cst_14 {dimension_numbers = #tpu.dot_dimension_numbers<[1], [0], [0], [1], [0, 0, 1, 1], [], []>} : vector<8x4xbf16>, vector<4x128xbf16>, vector<8x128xf32> -> vector<8x128xf32>
    %15 = arith.subf %13, %14 : vector<8x128xf32>
    %cst_15 = arith.constant dense<0.000000e+00> : vector<8x128xf32>
    %16 = tpu.matmul %11, %10, %cst_15 {dimension_numbers = #tpu.dot_dimension_numbers<[1], [0], [0], [1], [0, 0, 1, 1], [], []>} : vector<8x4xbf16>, vector<4x128xbf16>, vector<8x128xf32> -> vector<8x128xf32>
    %cst_16 = arith.constant dense<0.000000e+00> : vector<8x128xf32>
    %17 = tpu.matmul %12, %9, %cst_16 {dimension_numbers = #tpu.dot_dimension_numbers<[1], [0], [0], [1], [0, 0, 1, 1], [], []>} : vector<8x4xbf16>, vector<4x128xbf16>, vector<8x128xf32> -> vector<8x128xf32>
    %18 = arith.addf %16, %17 : vector<8x128xf32>
    %c0_17 = arith.constant 0 : index
    %c0_18 = arith.constant 0 : index
    %19 = vector.load %arg7[%c0_17, %c0_18] : memref<8x128xf32, #tpu.memory_space<vmem>>, vector<8x128xf32>
    %c0_19 = arith.constant 0 : index
    %c0_20 = arith.constant 0 : index
    %20 = vector.load %arg8[%c0_19, %c0_20] : memref<8x128xf32, #tpu.memory_space<vmem>>, vector<8x128xf32>
    %21 = arith.mulf %15, %19 : vector<8x128xf32>
    %22 = arith.mulf %18, %20 : vector<8x128xf32>
    %23 = arith.subf %21, %22 : vector<8x128xf32>
    %24 = arith.mulf %15, %20 : vector<8x128xf32>
    %25 = arith.mulf %18, %19 : vector<8x128xf32>
    %26 = arith.addf %24, %25 : vector<8x128xf32>
    %27 = arith.truncf %23 : vector<8x128xf32> to vector<8x128xbf16>
    %c0_21 = arith.constant 0 : index
    %c0_22 = arith.constant 0 : index
    %28 = vector.load %arg9[%c0_21, %c0_22] : memref<128x256xbf16, #tpu.memory_space<vmem>>, vector<128x256xbf16>
    %cst_23 = arith.constant dense<0.000000e+00> : vector<8x256xf32>
    %29 = tpu.matmul %27, %28, %cst_23 {dimension_numbers = #tpu.dot_dimension_numbers<[1], [0], [0], [1], [0, 0, 1, 1], [], []>} : vector<8x128xbf16>, vector<128x256xbf16>, vector<8x256xf32> -> vector<8x256xf32>
    %30 = arith.truncf %26 : vector<8x128xf32> to vector<8x128xbf16>
    %c0_24 = arith.constant 0 : index
    %c0_25 = arith.constant 0 : index
    %31 = vector.load %arg10[%c0_24, %c0_25] : memref<128x256xbf16, #tpu.memory_space<vmem>>, vector<128x256xbf16>
    %cst_26 = arith.constant dense<0.000000e+00> : vector<8x256xf32>
    %32 = tpu.matmul %30, %31, %cst_26 {dimension_numbers = #tpu.dot_dimension_numbers<[1], [0], [0], [1], [0, 0, 1, 1], [], []>} : vector<8x128xbf16>, vector<128x256xbf16>, vector<8x256xf32> -> vector<8x256xf32>
    %33 = arith.subf %29, %32 : vector<8x256xf32>
    %c0_27 = arith.constant 0 : index
    %c0_28 = arith.constant 0 : index
    %34 = vector.load %arg11[%c0_27, %c0_28] : memref<8x256xf32, #tpu.memory_space<vmem>>, vector<8x256xf32>
    tpu.vector_store %arg11[%c0_27, %c0_28], %33 {strides = array<i32>} : memref<8x256xf32, #tpu.memory_space<vmem>>, vector<8x256xf32>,
    return
  }
  func.func @transform_0(%arg0: i32) -> (i32, i32) {
    %c0_i32 = arith.constant 0 : i32
    %c0_i32_0 = arith.constant 0 : i32
    return %arg0, %c0_i32 : i32, i32
  }
  func.func @transform_1(%arg0: i32) -> (i32, i32) {
    %c0_i32 = arith.constant 0 : i32
    %c0_i32_0 = arith.constant 0 : i32
    %c0_i32_1 = arith.constant 0 : i32
    return %c0_i32, %c0_i32_0 : i32, i32
  }
  func.func @transform_2(%arg0: i32) -> (i32, i32) {
    %c0_i32 = arith.constant 0 : i32
    %c0_i32_0 = arith.constant 0 : i32
    %c0_i32_1 = arith.constant 0 : i32
    return %c0_i32, %c0_i32_0 : i32, i32
  }
  func.func @transform_3(%arg0: i32) -> (i32, i32) {
    %c0_i32 = arith.constant 0 : i32
    %c0_i32_0 = arith.constant 0 : i32
    %c0_i32_1 = arith.constant 0 : i32
    return %c0_i32, %c0_i32_0 : i32, i32
  }
  func.func @transform_4(%arg0: i32) -> (i32, i32) {
    %c0_i32 = arith.constant 0 : i32
    %c0_i32_0 = arith.constant 0 : i32
    %c0_i32_1 = arith.constant 0 : i32
    return %c0_i32, %c0_i32_0 : i32, i32
  }
  func.func @transform_5(%arg0: i32) -> (i32, i32) {
    %c0_i32 = arith.constant 0 : i32
    %c0_i32_0 = arith.constant 0 : i32
    %c0_i32_1 = arith.constant 0 : i32
    return %c0_i32, %c0_i32_0 : i32, i32
  }
  func.func @transform_6(%arg0: i32) -> (i32, i32) {
    %c0_i32 = arith.constant 0 : i32
    %c0_i32_0 = arith.constant 0 : i32
    %c0_i32_1 = arith.constant 0 : i32
    return %c0_i32, %c0_i32_0 : i32, i32
  }
  func.func @transform_7(%arg0: i32) -> (i32, i32) {
    %c0_i32 = arith.constant 0 : i32
    %c0_i32_0 = arith.constant 0 : i32
    %c0_i32_1 = arith.constant 0 : i32
    return %c0_i32, %c0_i32_0 : i32, i32
  }
  func.func @transform_8(%arg0: i32) -> (i32, i32) {
    %c0_i32 = arith.constant 0 : i32
    %c0_i32_0 = arith.constant 0 : i32
    %c0_i32_1 = arith.constant 0 : i32
    return %c0_i32, %c0_i32_0 : i32, i32
  }
  func.func @transform_9(%arg0: i32) -> (i32, i32) {
    %c0_i32 = arith.constant 0 : i32
    %c0_i32_0 = arith.constant 0 : i32
    %c0_i32_1 = arith.constant 0 : i32
    return %c0_i32, %c0_i32_0 : i32, i32
  }
  func.func @transform_10(%arg0: i32) -> (i32, i32) {
    %c0_i32 = arith.constant 0 : i32
    %c0_i32_0 = arith.constant 0 : i32
    return %arg0, %c0_i32 : i32, i32
  }
}

module attributes {stable_mosaic.version = 11 : i64} {
  func.func @_rfno_kernel(%arg0: i32, %arg1: memref<8x256xf32, #tpu.memory_space<vmem>>, %arg2: memref<4x8xbf16, #tpu.memory_space<vmem>>, %arg3: memref<8x4xbf16, #tpu.memory_space<vmem>>, %arg4: memref<8x4xbf16, #tpu.memory_space<vmem>>, %arg5: memref<256x128xbf16, #tpu.memory_space<vmem>>, %arg6: memref<256x128xbf16, #tpu.memory_space<vmem>>, %arg7: memref<8x128xf32, #tpu.memory_space<vmem>>, %arg8: memref<8x128xf32, #tpu.memory_space<vmem>>, %arg9: memref<128x256xbf16, #tpu.memory_space<vmem>>, %arg10: memref<128x256xbf16, #tpu.memory_space<vmem>>, %arg11: memref<8x256xf32, #tpu.memory_space<vmem>>) attributes {dimension_semantics = [#tpu.dimension_semantics<parallel>], iteration_bounds = array<i64: 1>, scalar_prefetch = 0 : i64, scratch_operands = 0 : i64, tpu.core_type = #tpu.core_type<tc>, window_params = [{transform_indices = @transform_0, window_bounds = array<i64: 8, 256>}, {pipeline_mode = #tpu.pipeline_mode<synchronous>, transform_indices = @transform_1, window_bounds = array<i64: 4, 8>}, {pipeline_mode = #tpu.pipeline_mode<synchronous>, transform_indices = @transform_2, window_bounds = array<i64: 8, 4>}, {pipeline_mode = #tpu.pipeline_mode<synchronous>, transform_indices = @transform_3, window_bounds = array<i64: 8, 4>}, {pipeline_mode = #tpu.pipeline_mode<synchronous>, transform_indices = @transform_4, window_bounds = array<i64: 256, 128>}, {pipeline_mode = #tpu.pipeline_mode<synchronous>, transform_indices = @transform_5, window_bounds = array<i64: 256, 128>}, {pipeline_mode = #tpu.pipeline_mode<synchronous>, transform_indices = @transform_6, window_bounds = array<i64: 8, 128>}, {pipeline_mode = #tpu.pipeline_mode<synchronous>, transform_indices = @transform_7, window_bounds = array<i64: 8, 128>}, {pipeline_mode = #tpu.pipeline_mode<synchronous>, transform_indices = @transform_8, window_bounds = array<i64: 128, 256>}, {pipeline_mode = #tpu.pipeline_mode<synchronous>, transform_indices = @transform_9, window_bounds = array<i64: 128, 256>}, {transform_indices = @transform_10, window_bounds = array<i64: 8, 256>}]} {
    %c0 = arith.constant 0 : index
    %c0_0 = arith.constant 0 : index
    %0 = vector.load %arg2[%c0, %c0_0] : memref<4x8xbf16, #tpu.memory_space<vmem>>, vector<4x8xbf16>
    %c0_1 = arith.constant 0 : index
    %c0_2 = arith.constant 0 : index
    %1 = vector.load %arg1[%c0_1, %c0_2] : memref<8x256xf32, #tpu.memory_space<vmem>>, vector<8x256xf32>
    %2 = arith.truncf %1 : vector<8x256xf32> to vector<8x256xbf16>
    %cst = arith.constant dense<0.000000e+00> : vector<4x256xf32>
    %3 = tpu.matmul %0, %2, %cst {dimension_numbers = #tpu.dot_dimension_numbers<[1], [0], [0], [1], [0, 0, 1, 1], [], []>} : vector<4x8xbf16>, vector<8x256xbf16>, vector<4x256xf32> -> vector<4x256xf32>
    %4 = arith.truncf %3 : vector<4x256xf32> to vector<4x256xbf16>
    %c0_3 = arith.constant 0 : index
    %c0_4 = arith.constant 0 : index
    %5 = vector.load %arg5[%c0_3, %c0_4] : memref<256x128xbf16, #tpu.memory_space<vmem>>, vector<256x128xbf16>
    %cst_5 = arith.constant dense<0.000000e+00> : vector<4x128xf32>
    %6 = tpu.matmul %4, %5, %cst_5 {dimension_numbers = #tpu.dot_dimension_numbers<[1], [0], [0], [1], [0, 0, 1, 1], [], []>} : vector<4x256xbf16>, vector<256x128xbf16>, vector<4x128xf32> -> vector<4x128xf32>
    %c0_6 = arith.constant 0 : index
    %c0_7 = arith.constant 0 : index
    %7 = vector.load %arg6[%c0_6, %c0_7] : memref<256x128xbf16, #tpu.memory_space<vmem>>, vector<256x128xbf16>
    %cst_8 = arith.constant dense<0.000000e+00> : vector<4x128xf32>
    %8 = tpu.matmul %4, %7, %cst_8 {dimension_numbers = #tpu.dot_dimension_numbers<[1], [0], [0], [1], [0, 0, 1, 1], [], []>} : vector<4x256xbf16>, vector<256x128xbf16>, vector<4x128xf32> -> vector<4x128xf32>
    %9 = arith.truncf %6 : vector<4x128xf32> to vector<4x128xbf16>
    %10 = arith.truncf %8 : vector<4x128xf32> to vector<4x128xbf16>
    %c0_9 = arith.constant 0 : index
    %c0_10 = arith.constant 0 : index
    %11 = vector.load %arg3[%c0_9, %c0_10] : memref<8x4xbf16, #tpu.memory_space<vmem>>, vector<8x4xbf16>
    %c0_11 = arith.constant 0 : index
    %c0_12 = arith.constant 0 : index
    %12 = vector.load %arg4[%c0_11, %c0_12] : memref<8x4xbf16, #tpu.memory_space<vmem>>, vector<8x4xbf16>
    %cst_13 = arith.constant dense<0.000000e+00> : vector<8x128xf32>
    %13 = tpu.matmul %11, %9, %cst_13 {dimension_numbers = #tpu.dot_dimension_numbers<[1], [0], [0], [1], [0, 0, 1, 1], [], []>} : vector<8x4xbf16>, vector<4x128xbf16>, vector<8x128xf32> -> vector<8x128xf32>
    %cst_14 = arith.constant dense<0.000000e+00> : vector<8x128xf32>
    %14 = tpu.matmul %12, %10, %cst_14 {dimension_numbers = #tpu.dot_dimension_numbers<[1], [0], [0], [1], [0, 0, 1, 1], [], []>} : vector<8x4xbf16>, vector<4x128xbf16>, vector<8x128xf32> -> vector<8x128xf32>
    %15 = arith.subf %13, %14 : vector<8x128xf32>
    %cst_15 = arith.constant dense<0.000000e+00> : vector<8x128xf32>
    %16 = tpu.matmul %11, %10, %cst_15 {dimension_numbers = #tpu.dot_dimension_numbers<[1], [0], [0], [1], [0, 0, 1, 1], [], []>} : vector<8x4xbf16>, vector<4x128xbf16>, vector<8x128xf32> -> vector<8x128xf32>
    %cst_16 = arith.constant dense<0.000000e+00> : vector<8x128xf32>
    %17 = tpu.matmul %12, %9, %cst_16 {dimension_numbers = #tpu.dot_dimension_numbers<[1], [0], [0], [1], [0, 0, 1, 1], [], []>} : vector<8x4xbf16>, vector<4x128xbf16>, vector<8x128xf32> -> vector<8x128xf32>
    %18 = arith.addf %16, %17 : vector<8x128xf32>
    %c0_17 = arith.constant 0 : index
    %c0_18 = arith.constant 0 : index
    %19 = vector.load %arg7[%c0_17, %c0_18] : memref<8x128xf32, #tpu.memory_space<vmem>>, vector<8x128xf32>
    %c0_19 = arith.constant 0 : index
    %c0_20 = arith.constant 0 : index
    %20 = vector.load %arg8[%c0_19, %c0_20] : memref<8x128xf32, #tpu.memory_space<vmem>>, vector<8x128xf32>
    %21 = arith.mulf %15, %19 : vector<8x128xf32>
    %22 = arith.mulf %18, %20 : vector<8x128xf32>
    %23 = arith.subf %21, %22 : vector<8x128xf32>
    %24 = arith.mulf %15, %20 : vector<8x128xf32>
    %25 = arith.mulf %18, %19 : vector<8x128xf32>
    %26 = arith.addf %24, %25 : vector<8x128xf32>
    %27 = arith.truncf %23 : vector<8x128xf32> to vector<8x128xbf16>
    %c0_21 = arith.constant 0 : index
    %c0_22 = arith.constant 0 : index
    %28 = vector.load %arg9[%c0_21, %c0_22] : memref<128x256xbf16, #tpu.memory_space<vmem>>, vector<128x256xbf16>
    %cst_23 = arith.constant dense<0.000000e+00> : vector<8x256xf32>
    %29 = tpu.matmul %27, %28, %cst_23 {dimension_numbers = #tpu.dot_dimension_numbers<[1], [0], [0], [1], [0, 0, 1, 1], [], []>} : vector<8x128xbf16>, vector<128x256xbf16>, vector<8x256xf32> -> vector<8x256xf32>
    %30 = arith.truncf %26 : vector<8x128xf32> to vector<8x128xbf16>
    %c0_24 = arith.constant 0 : index
    %c0_25 = arith.constant 0 : index
    %31 = vector.load %arg10[%c0_24, %c0_25] : memref<128x256xbf16, #tpu.memory_space<vmem>>, vector<128x256xbf16>
    %cst_26 = arith.constant dense<0.000000e+00> : vector<8x256xf32>
    %32 = tpu.matmul %30, %31, %cst_26 {dimension_numbers = #tpu.dot_dimension_numbers<[1], [0], [0], [1], [0, 0, 1, 1], [], []>} : vector<8x128xbf16>, vector<128x256xbf16>, vector<8x256xf32> -> vector<8x256xf32>
    %33 = arith.subf %29, %32 : vector<8x256xf32>
    %c0_27 = arith.constant 0 : index
    %c0_28 = arith.constant 0 : index
    %34 = vector.load %arg11[%c0_27, %c0_28] : memref<8x256xf32, #tpu.memory_space<vmem>>, vector<8x256xf32>
    tpu.vector_store %arg11[%c0_27, %c0_28], %33 {strides = array<i32>} : memref<8x256xf32, #tpu.memory_space<vmem>>, vector<8x256xf32>,
    return
  }
  func.func @transform_0(%arg0: i32) -> (i32, i32) {
    %c0_i32 = arith.constant 0 : i32
    %c0_i32_0 = arith.constant 0 : i32
    return %arg0, %c0_i32 : i32, i32
  }
  func.func @transform_1(%arg0: i32) -> (i32, i32) {
    %c0_i32 = arith.constant 0 : i32
    %c0_i32_0 = arith.constant 0 : i32
    %c0_i32_1 = arith.constant 0 : i32
    return %c0_i32, %c0_i32_0 : i32, i32
  }
  func.func @transform_2(%arg0: i32) -> (i32, i32) {
    %c0_i32 = arith.constant 0 : i32
    %c0_i32_0 = arith.constant 0 : i32
    %c0_i32_1 = arith.constant 0 : i32
    return %c0_i32, %c0_i32_0 : i32, i32
  }
  func.func @transform_3(%arg0: i32) -> (i32, i32) {
    %c0_i32 = arith.constant 0 : i32
    %c0_i32_0 = arith.constant 0 : i32
    %c0_i32_1 = arith.constant 0 : i32
    return %c0_i32, %c0_i32_0 : i32, i32
  }
  func.func @transform_4(%arg0: i32) -> (i32, i32) {
    %c0_i32 = arith.constant 0 : i32
    %c0_i32_0 = arith.constant 0 : i32
    %c0_i32_1 = arith.constant 0 : i32
    return %c0_i32, %c0_i32_0 : i32, i32
  }
  func.func @transform_5(%arg0: i32) -> (i32, i32) {
    %c0_i32 = arith.constant 0 : i32
    %c0_i32_0 = arith.constant 0 : i32
    %c0_i32_1 = arith.constant 0 : i32
    return %c0_i32, %c0_i32_0 : i32, i32
  }
  func.func @transform_6(%arg0: i32) -> (i32, i32) {
    %c0_i32 = arith.constant 0 : i32
    %c0_i32_0 = arith.constant 0 : i32
    %c0_i32_1 = arith.constant 0 : i32
    return %c0_i32, %c0_i32_0 : i32, i32
  }
  func.func @transform_7(%arg0: i32) -> (i32, i32) {
    %c0_i32 = arith.constant 0 : i32
    %c0_i32_0 = arith.constant 0 : i32
    %c0_i32_1 = arith.constant 0 : i32
    return %c0_i32, %c0_i32_0 : i32, i32
  }
  func.func @transform_8(%arg0: i32) -> (i32, i32) {
    %c0_i32 = arith.constant 0 : i32
    %c0_i32_0 = arith.constant 0 : i32
    %c0_i32_1 = arith.constant 0 : i32
    return %c0_i32, %c0_i32_0 : i32, i32
  }
  func.func @transform_9(%arg0: i32) -> (i32, i32) {
    %c0_i32 = arith.constant 0 : i32
    %c0_i32_0 = arith.constant 0 : i32
    %c0_i32_1 = arith.constant 0 : i32
    return %c0_i32, %c0_i32_0 : i32, i32
  }
  func.func @transform_10(%arg0: i32) -> (i32, i32) {
    %c0_i32 = arith.constant 0 : i32
    %c0_i32_0 = arith.constant 0 : i32
    return %arg0, %c0_i32 : i32, i32
  }
}

</mosaic_0001>

<llo_original>
// kernel: tpu_custom_call.1
$region0: #{tpu_custom_call.1}
  #allocation0 [shape = 'u32[]', space=smem, size = 0x4, offset = 0x4, fixed_abs, tag = 'smem constant byte address 0x4 - core index']
  #allocation1 [shape = 'u32[144,128]{1,0:T(1,128)}', space=vmem, size = 0x12000, scoped, tag = 'internal scratch']
  %s0 = inlined_call_operand.hbm [shape: f32[8,256], index: 0, kind: input, shape index: {}]
  %s1 = inlined_call_operand.vmem [shape: bf16[4,8], index: 1, kind: input, shape index: {}]
  %s2 = inlined_call_operand.vmem [shape: bf16[8,4], index: 2, kind: input, shape index: {}]
  %s3 = inlined_call_operand.vmem [shape: bf16[8,4], index: 3, kind: input, shape index: {}]
  %s4 = inlined_call_operand.hbm [shape: bf16[256,128], index: 4, kind: input, shape index: {}]
  %s5 = inlined_call_operand.hbm [shape: bf16[256,128], index: 5, kind: input, shape index: {}]
  %s6 = inlined_call_operand.vmem [shape: f32[8,128], index: 6, kind: input, shape index: {}]
  %s7 = inlined_call_operand.vmem [shape: f32[8,128], index: 7, kind: input, shape index: {}]
  %s8 = inlined_call_operand.hbm [shape: bf16[128,256], index: 8, kind: input, shape index: {}]
  %s9 = inlined_call_operand.hbm [shape: bf16[128,256], index: 9, kind: input, shape index: {}]
  %s10 = inlined_call_operand.hbm [shape: f32[8,256], index: 10, kind: output, shape index: {}]
  %s11 = sld [smem:[#allocation0]]
  $region70: #{tpu_custom_call.1} parent=0
    _
  %s13 = ssub.s32 1, %s11
  %s14 = scalar_select 0, %s13, %s11
  $region1: #{tpu_custom_call.1} parent=0
    #allocation2 [shape = 'u8[8192]{0}', space=vmem, size = 0x2000, scoped, tag = 'input window, operand 0, single buffered']
    #allocation3 [shape = 's32[1]{0}', space=sflag, size = 0x4, scoped, tag = 'scoped memory for tpu_custom_call.1']
    #allocation4 [shape = 's32[1]{0}', space=sflag, size = 0x4, scoped, tag = 'scoped memory for tpu_custom_call.1']
    #allocation5 [shape = 'u8[65536]{0}', space=vmem, size = 0x10000, scoped, tag = 'input window, operand 4, single buffered']
    #allocation6 [shape = 's32[1]{0}', space=sflag, size = 0x4, scoped, tag = 'scoped memory for tpu_custom_call.1']
    #allocation7 [shape = 'u8[65536]{0}', space=vmem, size = 0x10000, scoped, tag = 'input window, operand 5, single buffered']
    #allocation8 [shape = 'u8[65536]{0}', space=vmem, size = 0x10000, scoped, tag = 'input window, operand 8, single buffered']
    #allocation9 [shape = 's32[1]{0}', space=sflag, size = 0x4, scoped, tag = 'scoped memory for tpu_custom_call.1']
    #allocation10 [shape = 'u8[65536]{0}', space=vmem, size = 0x10000, scoped, tag = 'input window, operand 9, single buffered']
    #allocation11 [shape = 'u8[8192]{0}', space=vmem, size = 0x2000, scoped, tag = 'output window, operand 0, single buffered']
    %15 = vsyncpa [#allocation3], 0
    %16 = vsyncpa [#allocation6], 0
    %17 = vsyncpa [#allocation9], 0
    %18 = vsyncpa [#allocation4], 0
    // Predicated region
    $region2: #{tpu_custom_call.1} parent=1 // pred_check
      _
    $region3: #{tpu_custom_call.1} parent=1 // pred_check_branch
      %20 = sbr.rel (0) target = $region5
    $region4: #{tpu_custom_call.1} parent=1 // pred_region
      %s22 = ssub.s32 256, 256
      %23 = vsyncadd [#allocation3], %s22
      %s25 = sshll.u32 [#allocation2], 4
      %s26 = int_to_ptr.vmem [resolvable:$true] %s25
      %28 = dma.hbm_to_vmem [thread:$0]  %s0, 256, %s26, [#allocation3]
    $region5: #{tpu_custom_call.1} parent=1 // pred_fallthru
      _
    // Predicated region
    $region6: #{tpu_custom_call.1} parent=1 // pred_check
      _
    $region7: #{tpu_custom_call.1} parent=1 // pred_check_branch
      %30 = sbr.rel (0) target = $region9
    $region8: #{tpu_custom_call.1} parent=1 // pred_region
      _
    $region9: #{tpu_custom_call.1} parent=1 // pred_fallthru
      _
    // Predicated region
    $region10: #{tpu_custom_call.1} parent=1 // pred_check
      _
    $region11: #{tpu_custom_call.1} parent=1 // pred_check_branch
      %32 = sbr.rel (0) target = $region13
    $region12: #{tpu_custom_call.1} parent=1 // pred_region
      _
    $region13: #{tpu_custom_call.1} parent=1 // pred_fallthru
      _
    // Predicated region
    $region14: #{tpu_custom_call.1} parent=1 // pred_check
      _
    $region15: #{tpu_custom_call.1} parent=1 // pred_check_branch
      %34 = sbr.rel (0) target = $region17
    $region16: #{tpu_custom_call.1} parent=1 // pred_region
      _
    $region17: #{tpu_custom_call.1} parent=1 // pred_fallthru
      _
    // Predicated region
    $region18: #{tpu_custom_call.1} parent=1 // pred_check
      _
    $region19: #{tpu_custom_call.1} parent=1 // pred_check_branch
      %36 = sbr.rel (0) target = $region21
    $region20: #{tpu_custom_call.1} parent=1 // pred_region
      %s38 = ssub.s32 2048, 2048
      %39 = vsyncadd [#allocation6], %s38
      %s40 = sshll.u32 [#allocation5], 4
      %s41 = int_to_ptr.vmem [resolvable:$true] %s40
      %46 = dma.hbm_to_vmem [thread:$0]  %s4, 2048, %s41, [#allocation6], 64, 64, 4
    $region21: #{tpu_custom_call.1} parent=1 // pred_fallthru
      _
    // Predicated region
    $region22: #{tpu_custom_call.1} parent=1 // pred_check
      _
    $region23: #{tpu_custom_call.1} parent=1 // pred_check_branch
      %48 = sbr.rel (0) target = $region25
    $region24: #{tpu_custom_call.1} parent=1 // pred_region
      %s50 = ssub.s32 2048, 2048
      %51 = vsyncadd [#allocation6], %s50
      %s52 = sshll.u32 [#allocation7], 4
      %s53 = int_to_ptr.vmem [resolvable:$true] %s52
      %58 = dma.hbm_to_vmem [thread:$0]  %s5, 2048, %s53, [#allocation6], 64, 64, 4
    $region25: #{tpu_custom_call.1} parent=1 // pred_fallthru
      _
    // Predicated region
    $region26: #{tpu_custom_call.1} parent=1 // pred_check
      _
    $region27: #{tpu_custom_call.1} parent=1 // pred_check_branch
      %60 = sbr.rel (0) target = $region29
    $region28: #{tpu_custom_call.1} parent=1 // pred_region
      _
    $region29: #{tpu_custom_call.1} parent=1 // pred_fallthru
      _
    // Predicated region
    $region30: #{tpu_custom_call.1} parent=1 // pred_check
      _
    $region31: #{tpu_custom_call.1} parent=1 // pred_check_branch
      %62 = sbr.rel (0) target = $region33
    $region32: #{tpu_custom_call.1} parent=1 // pred_region
      _
    $region33: #{tpu_custom_call.1} parent=1 // pred_fallthru
      _
    // Predicated region
    $region34: #{tpu_custom_call.1} parent=1 // pred_check
      _
    $region35: #{tpu_custom_call.1} parent=1 // pred_check_branch
      %64 = sbr.rel (0) target = $region37
    $region36: #{tpu_custom_call.1} parent=1 // pred_region
      %s66 = ssub.s32 2048, 2048
      %67 = vsyncadd [#allocation9], %s66
      %s68 = sshll.u32 [#allocation8], 4
      %s69 = int_to_ptr.vmem [resolvable:$true] %s68
      %74 = dma.hbm_to_vmem [thread:$0]  %s8, 2048, %s69, [#allocation9], 128, 128, 8
    $region37: #{tpu_custom_call.1} parent=1 // pred_fallthru
      _
    // Predicated region
    $region38: #{tpu_custom_call.1} parent=1 // pred_check
      _
    $region39: #{tpu_custom_call.1} parent=1 // pred_check_branch
      %76 = sbr.rel (0) target = $region41
    $region40: #{tpu_custom_call.1} parent=1 // pred_region
      %s78 = ssub.s32 2048, 2048
      %79 = vsyncadd [#allocation9], %s78
      %s80 = sshll.u32 [#allocation10], 4
      %s81 = int_to_ptr.vmem [resolvable:$true] %s80
      %86 = dma.hbm_to_vmem [thread:$0]  %s9, 2048, %s81, [#allocation9], 128, 128, 8
    $region41: #{tpu_custom_call.1} parent=1 // pred_fallthru
      _
    // Predicated region
    $region42: #{tpu_custom_call.1} parent=1 // pred_check
      _
    $region43: #{tpu_custom_call.1} parent=1 // pred_check_branch
      %88 = sbr.rel (0) target = $region45
    $region44: #{tpu_custom_call.1} parent=1 // pred_region
      %89 = dma.done [#allocation3], 256
    $region45: #{tpu_custom_call.1} parent=1 // pred_fallthru
      _
    // Predicated region
    $region46: #{tpu_custom_call.1} parent=1 // pred_check
      _
    $region47: #{tpu_custom_call.1} parent=1 // pred_check_branch
      %91 = sbr.rel (0) target = $region49
    $region48: #{tpu_custom_call.1} parent=1 // pred_region
      %92 = dma.done [#allocation6], 2048
    $region49: #{tpu_custom_call.1} parent=1 // pred_fallthru
      _
    // Predicated region
    $region50: #{tpu_custom_call.1} parent=1 // pred_check
      _
    $region51: #{tpu_custom_call.1} parent=1 // pred_check_branch
      %94 = sbr.rel (0) target = $region53
    $region52: #{tpu_custom_call.1} parent=1 // pred_region
      %95 = dma.done [#allocation6], 2048
    $region53: #{tpu_custom_call.1} parent=1 // pred_fallthru
      _
    // Predicated region
    $region54: #{tpu_custom_call.1} parent=1 // pred_check
      _
    $region55: #{tpu_custom_call.1} parent=1 // pred_check_branch
      %97 = sbr.rel (0) target = $region57
    $region56: #{tpu_custom_call.1} parent=1 // pred_region
      %98 = dma.done [#allocation9], 2048
    $region57: #{tpu_custom_call.1} parent=1 // pred_fallthru
      _
    // Predicated region
    $region58: #{tpu_custom_call.1} parent=1 // pred_check
      _
    $region59: #{tpu_custom_call.1} parent=1 // pred_check_branch
      %100 = sbr.rel (0) target = $region61
    $region60: #{tpu_custom_call.1} parent=1 // pred_region
      %101 = dma.done [#allocation9], 2048
    $region61: #{tpu_custom_call.1} parent=1 // pred_fallthru
      _
    %v103 = vld [vmem:[%s1] sm:$0x3]
    %v104 = vld [vmem:[#allocation2] sm:$0xff]
    %v105 = vld [vmem:[#allocation2 + $0x8] sm:$0xff]
    %v106 = vpack.c.bf16 %v104, %v104
    %v107 = vpack.c.bf16 %v105, %v105
    %vm108 = vcmask 64512
    %v110 = vsel %vm108, %v103, 0
    %vm112 = vcmask 1043456
    %v114 = vsel %vm112, %v106, 0
    %v117 = vsel %vm112, %v107, 0
    %119 = vmatprep.subr.bf16.mxu0 %v117
    %120 = vmatpush1.bf16.msra.mxu0 %v114
    %121 = vmatprep.subr.bf16.mxu0 0
    %122 = vmatpush1.bf16.msra.mxu0 0
    %123 = vmatprep.subr.bf16.mxu0 0
    %124 = vmatpush1.bf16.msra.mxu0 0
    %125 = vmatprep.subr.bf16.mxu0 0
    %126 = vmatpush1.bf16.msra.mxu0 0
    %127 = vmatprep.subr.bf16.mxu0 0
    %128 = vmatpush1.bf16.msra.mxu0 0
    %129 = vmatprep.subr.bf16.mxu0 0
    %130 = vmatpush1.bf16.msra.mxu0 0
    %131 = vmatprep.subr.bf16.mxu0 0
    %132 = vmatpush1.bf16.msra.mxu0 0
    %133 = vmatprep.subr.bf16.mxu0 0
    %134 = vmatpush1.bf16.msra.mxu0 0
    %135 = vmatprep.subr.bf16.mxu0 0
    %136 = vmatpush1.bf16.msra.mxu0 0
    %137 = vmatprep.subr.bf16.mxu0 0
    %138 = vmatpush1.bf16.msra.mxu0 0
    %139 = vmatprep.subr.bf16.mxu0 0
    %140 = vmatpush1.bf16.msra.mxu0 0
    %141 = vmatprep.subr.bf16.mxu0 0
    %142 = vmatpush1.bf16.msra.mxu0 0
    %143 = vmatprep.subr.bf16.mxu0 0
    %144 = vmatpush1.bf16.msra.mxu0 0
    %145 = vmatprep.subr.bf16.mxu0 0
    %146 = vmatpush1.bf16.msra.mxu0 0
    %147 = vmatprep.subr.bf16.mxu0 0
    %148 = vmatpush1.bf16.msra.mxu0 0
    %149 = vmatprep.subr.bf16.mxu0 0
    %150 = vmatpush1.bf16.msra.mxu0 0
    %151 = vmatprep.mubr.bf16.mxu0 0
    %152 = vmatmul.mubr.bf16.gmra.mrb[0].mxu0 %v110
    %v153 = vpop.f32.mrb[0].mxu0
    %v154 = vadd.f32 0.0, %v153
    %v155 = vpop.f32.mrb[0].mxu0
    %v156 = vadd.f32 0.0, %v155
    %v157 = vpop.f32.mrb[0].mxu0
    %v158 = vpop.f32.mrb[0].mxu0
    %159 = vdwg.mxu0
    %v160 = vpack.c.bf16 %v154, %v154
    %v161 = vpack.c.bf16 %v156, %v156
    %v162 = vld [vmem:[#allocation5] sm:$0xf]
    %v163 = vld [vmem:[#allocation5 + $0x4] sm:$0xf]
    %v164 = vld [vmem:[#allocation5 + $0x8] sm:$0xf]
    %v165 = vld [vmem:[#allocation5 + $0xc] sm:$0xf]
    %v166 = vld [vmem:[#allocation5 + $0x10] sm:$0xf]
    %v167 = vld [vmem:[#allocation5 + $0x14] sm:$0xf]
    %v168 = vld [vmem:[#allocation5 + $0x18] sm:$0xf]
    %v169 = vld [vmem:[#allocation5 + $0x1c] sm:$0xf]
    %v170 = vld [vmem:[#allocation5 + $0x20] sm:$0xf]
    %v171 = vld [vmem:[#allocation5 + $0x24] sm:$0xf]
    %v172 = vld [vmem:[#allocation5 + $0x28] sm:$0xf]
    %v173 = vld [vmem:[#allocation5 + $0x2c] sm:$0xf]
    %v174 = vld [vmem:[#allocation5 + $0x30] sm:$0xf]
    %v175 = vld [vmem:[#allocation5 + $0x34] sm:$0xf]
    %v176 = vld [vmem:[#allocation5 + $0x38] sm:$0xf]
    %v177 = vld [vmem:[#allocation5 + $0x3c] sm:$0xf]
    %v178 = vld [vmem:[#allocation5 + $0x40] sm:$0xf]
    %v179 = vld [vmem:[#allocation5 + $0x44] sm:$0xf]
    %v180 = vld [vmem:[#allocation5 + $0x48] sm:$0xf]
    %v181 = vld [vmem:[#allocation5 + $0x4c] sm:$0xf]
    %v182 = vld [vmem:[#allocation5 + $0x50] sm:$0xf]
    %v183 = vld [vmem:[#allocation5 + $0x54] sm:$0xf]
    %v184 = vld [vmem:[#allocation5 + $0x58] sm:$0xf]
    %v185 = vld [vmem:[#allocation5 + $0x5c] sm:$0xf]
    %v186 = vld [vmem:[#allocation5 + $0x60] sm:$0xf]
    %v187 = vld [vmem:[#allocation5 + $0x64] sm:$0xf]
    %v188 = vld [vmem:[#allocation5 + $0x68] sm:$0xf]
    %v189 = vld [vmem:[#allocation5 + $0x6c] sm:$0xf]
    %v190 = vld [vmem:[#allocation5 + $0x70] sm:$0xf]
    %v191 = vld [vmem:[#allocation5 + $0x74] sm:$0xf]
    %v192 = vld [vmem:[#allocation5 + $0x78] sm:$0xf]
    %v193 = vld [vmem:[#allocation5 + $0x7c] sm:$0xf]
    %v226 = vunpack.c.l.b16 %v162
    %v227 = vunpack.c.l.b16 %v163
    %v228 = vunpack.c.l.b16 %v164
    %v229 = vunpack.c.l.b16 %v165
    %v230 = vunpack.c.l.b16 %v166
    %v231 = vunpack.c.l.b16 %v167
    %v232 = vunpack.c.l.b16 %v168
    %v233 = vunpack.c.l.b16 %v169
    %v234 = vunpack.c.l.b16 %v170
    %v235 = vunpack.c.l.b16 %v171
    %v236 = vunpack.c.l.b16 %v172
    %v237 = vunpack.c.l.b16 %v173
    %v238 = vunpack.c.l.b16 %v174
    %v239 = vunpack.c.l.b16 %v175
    %v240 = vunpack.c.l.b16 %v176
    %v241 = vunpack.c.l.b16 %v177
    %v242 = vunpack.c.l.b16 %v178
    %v243 = vunpack.c.l.b16 %v179
    %v244 = vunpack.c.l.b16 %v180
    %v245 = vunpack.c.l.b16 %v181
    %v246 = vunpack.c.l.b16 %v182
    %v247 = vunpack.c.l.b16 %v183
    %v248 = vunpack.c.l.b16 %v184
    %v249 = vunpack.c.l.b16 %v185
    %v250 = vunpack.c.l.b16 %v186
    %v251 = vunpack.c.l.b16 %v187
    %v252 = vunpack.c.l.b16 %v188
    %v253 = vunpack.c.l.b16 %v189
    %v254 = vunpack.c.l.b16 %v190
    %v255 = vunpack.c.l.b16 %v191
    %v256 = vunpack.c.l.b16 %v192
    %v257 = vunpack.c.l.b16 %v193
    %v258 = vpack.c.b16 %v227, %v226
    %v259 = vpack.c.b16 %v229, %v228
    %v260 = vpack.c.b16 %v231, %v230
    %v261 = vpack.c.b16 %v233, %v232
    %v262 = vpack.c.b16 %v235, %v234
    %v263 = vpack.c.b16 %v237, %v236
    %v264 = vpack.c.b16 %v239, %v238
    %v265 = vpack.c.b16 %v241, %v240
    %v266 = vpack.c.b16 %v243, %v242
    %v267 = vpack.c.b16 %v245, %v244
    %v268 = vpack.c.b16 %v247, %v246
    %v269 = vpack.c.b16 %v249, %v248
    %v270 = vpack.c.b16 %v251, %v250
    %v271 = vpack.c.b16 %v253, %v252
    %v272 = vpack.c.b16 %v255, %v254
    %v273 = vpack.c.b16 %v257, %v256
    %290 = vmatprep.subr.bf16.mxu0 0
    %291 = vmatpush1.bf16.msra.mxu0 %v258
    %292 = vmatprep.subr.bf16.mxu0 0
    %293 = vmatpush1.bf16.msra.mxu0 %v259
    %294 = vmatprep.subr.bf16.mxu0 0
    %295 = vmatpush1.bf16.msra.mxu0 %v260
    %296 = vmatprep.subr.bf16.mxu0 0
    %297 = vmatpush1.bf16.msra.mxu0 %v261
    %298 = vmatprep.subr.bf16.mxu0 0
    %299 = vmatpush1.bf16.msra.mxu0 %v262
    %300 = vmatprep.subr.bf16.mxu0 0
    %301 = vmatpush1.bf16.msra.mxu0 %v263
    %302 = vmatprep.subr.bf16.mxu0 0
    %303 = vmatpush1.bf16.msra.mxu0 %v264
    %304 = vmatprep.subr.bf16.mxu0 0
    %305 = vmatpush1.bf16.msra.mxu0 %v265
    %306 = vmatprep.subr.bf16.mxu0 0
    %307 = vmatpush1.bf16.msra.mxu0 %v266
    %308 = vmatprep.subr.bf16.mxu0 0
    %309 = vmatpush1.bf16.msra.mxu0 %v267
    %310 = vmatprep.subr.bf16.mxu0 0
    %311 = vmatpush1.bf16.msra.mxu0 %v268
    %312 = vmatprep.subr.bf16.mxu0 0
    %313 = vmatpush1.bf16.msra.mxu0 %v269
    %314 = vmatprep.subr.bf16.mxu0 0
    %315 = vmatpush1.bf16.msra.mxu0 %v270
    %316 = vmatprep.subr.bf16.mxu0 0
    %317 = vmatpush1.bf16.msra.mxu0 %v271
    %318 = vmatprep.subr.bf16.mxu0 0
    %319 = vmatpush1.bf16.msra.mxu0 %v272
    %320 = vmatprep.subr.bf16.mxu0 0
    %321 = vmatpush1.bf16.msra.mxu0 %v273
    %322 = vmatprep.mubr.bf16.mxu0 %v161
    %323 = vmatmul.mubr.bf16.gmra.mrb[0].mxu0 %v160
    %v324 = vpop.f32.mrb[0].mxu0
    %v325 = vadd.f32 0.0, %v324
    %v326 = vpop.f32.mrb[0].mxu0
    %v327 = vpop.f32.mrb[0].mxu0
    %v328 = vpop.f32.mrb[0].mxu0
    %329 = vdwg.mxu0
    %v330 = vld [vmem:[#allocation7] sm:$0xf]
    %v331 = vld [vmem:[#allocation7 + $0x4] sm:$0xf]
    %v332 = vld [vmem:[#allocation7 + $0x8] sm:$0xf]
    %v333 = vld [vmem:[#allocation7 + $0xc] sm:$0xf]
    %v334 = vld [vmem:[#allocation7 + $0x10] sm:$0xf]
    %v335 = vld [vmem:[#allocation7 + $0x14] sm:$0xf]
    %v336 = vld [vmem:[#allocation7 + $0x18] sm:$0xf]
    %v337 = vld [vmem:[#allocation7 + $0x1c] sm:$0xf]
    %v338 = vld [vmem:[#allocation7 + $0x20] sm:$0xf]
    %v339 = vld [vmem:[#allocation7 + $0x24] sm:$0xf]
    %v340 = vld [vmem:[#allocation7 + $0x28] sm:$0xf]
    %v341 = vld [vmem:[#allocation7 + $0x2c] sm:$0xf]
    %v342 = vld [vmem:[#allocation7 + $0x30] sm:$0xf]
    %v343 = vld [vmem:[#allocation7 + $0x34] sm:$0xf]
    %v344 = vld [vmem:[#allocation7 + $0x38] sm:$0xf]
    %v345 = vld [vmem:[#allocation7 + $0x3c] sm:$0xf]
    %v346 = vld [vmem:[#allocation7 + $0x40] sm:$0xf]
    %v347 = vld [vmem:[#allocation7 + $0x44] sm:$0xf]
    %v348 = vld [vmem:[#allocation7 + $0x48] sm:$0xf]
    %v349 = vld [vmem:[#allocation7 + $0x4c] sm:$0xf]
    %v350 = vld [vmem:[#allocation7 + $0x50] sm:$0xf]
    %v351 = vld [vmem:[#allocation7 + $0x54] sm:$0xf]
    %v352 = vld [vmem:[#allocation7 + $0x58] sm:$0xf]
    %v353 = vld [vmem:[#allocation7 + $0x5c] sm:$0xf]
    %v354 = vld [vmem:[#allocation7 + $0x60] sm:$0xf]
    %v355 = vld [vmem:[#allocation7 + $0x64] sm:$0xf]
    %v356 = vld [vmem:[#allocation7 + $0x68] sm:$0xf]
    %v357 = vld [vmem:[#allocation7 + $0x6c] sm:$0xf]
    %v358 = vld [vmem:[#allocation7 + $0x70] sm:$0xf]
    %v359 = vld [vmem:[#allocation7 + $0x74] sm:$0xf]
    %v360 = vld [vmem:[#allocation7 + $0x78] sm:$0xf]
    %v361 = vld [vmem:[#allocation7 + $0x7c] sm:$0xf]
    %v394 = vunpack.c.l.b16 %v330
    %v395 = vunpack.c.l.b16 %v331
    %v396 = vunpack.c.l.b16 %v332
    %v397 = vunpack.c.l.b16 %v333
    %v398 = vunpack.c.l.b16 %v334
    %v399 = vunpack.c.l.b16 %v335
    %v400 = vunpack.c.l.b16 %v336
    %v401 = vunpack.c.l.b16 %v337
    %v402 = vunpack.c.l.b16 %v338
    %v403 = vunpack.c.l.b16 %v339
    %v404 = vunpack.c.l.b16 %v340
    %v405 = vunpack.c.l.b16 %v341
    %v406 = vunpack.c.l.b16 %v342
    %v407 = vunpack.c.l.b16 %v343
    %v408 = vunpack.c.l.b16 %v344
    %v409 = vunpack.c.l.b16 %v345
    %v410 = vunpack.c.l.b16 %v346
    %v411 = vunpack.c.l.b16 %v347
    %v412 = vunpack.c.l.b16 %v348
    %v413 = vunpack.c.l.b16 %v349
    %v414 = vunpack.c.l.b16 %v350
    %v415 = vunpack.c.l.b16 %v351
    %v416 = vunpack.c.l.b16 %v352
    %v417 = vunpack.c.l.b16 %v353
    %v418 = vunpack.c.l.b16 %v354
    %v419 = vunpack.c.l.b16 %v355
    %v420 = vunpack.c.l.b16 %v356
    %v421 = vunpack.c.l.b16 %v357
    %v422 = vunpack.c.l.b16 %v358
    %v423 = vunpack.c.l.b16 %v359
    %v424 = vunpack.c.l.b16 %v360
    %v425 = vunpack.c.l.b16 %v361
    %v426 = vpack.c.b16 %v395, %v394
    %v427 = vpack.c.b16 %v397, %v396
    %v428 = vpack.c.b16 %v399, %v398
    %v429 = vpack.c.b16 %v401, %v400
    %v430 = vpack.c.b16 %v403, %v402
    %v431 = vpack.c.b16 %v405, %v404
    %v432 = vpack.c.b16 %v407, %v406
    %v433 = vpack.c.b16 %v409, %v408
    %v434 = vpack.c.b16 %v411, %v410
    %v435 = vpack.c.b16 %v413, %v412
    %v436 = vpack.c.b16 %v415, %v414
    %v437 = vpack.c.b16 %v417, %v416
    %v438 = vpack.c.b16 %v419, %v418
    %v439 = vpack.c.b16 %v421, %v420
    %v440 = vpack.c.b16 %v423, %v422
    %v441 = vpack.c.b16 %v425, %v424
    %458 = vmatprep.subr.bf16.mxu0 0
    %459 = vmatpush1.bf16.msra.mxu0 %v426
    %460 = vmatprep.subr.bf16.mxu0 0
    %461 = vmatpush1.bf16.msra.mxu0 %v427
    %462 = vmatprep.subr.bf16.mxu0 0
    %463 = vmatpush1.bf16.msra.mxu0 %v428
    %464 = vmatprep.subr.bf16.mxu0 0
    %465 = vmatpush1.bf16.msra.mxu0 %v429
    %466 = vmatprep.subr.bf16.mxu0 0
    %467 = vmatpush1.bf16.msra.mxu0 %v430
    %468 = vmatprep.subr.bf16.mxu0 0
    %469 = vmatpush1.bf16.msra.mxu0 %v431
    %470 = vmatprep.subr.bf16.mxu0 0
    %471 = vmatpush1.bf16.msra.mxu0 %v432
    %472 = vmatprep.subr.bf16.mxu0 0
    %473 = vmatpush1.bf16.msra.mxu0 %v433
    %474 = vmatprep.subr.bf16.mxu0 0
    %475 = vmatpush1.bf16.msra.mxu0 %v434
    %476 = vmatprep.subr.bf16.mxu0 0
    %477 = vmatpush1.bf16.msra.mxu0 %v435
    %478 = vmatprep.subr.bf16.mxu0 0
    %479 = vmatpush1.bf16.msra.mxu0 %v436
    %480 = vmatprep.subr.bf16.mxu0 0
    %481 = vmatpush1.bf16.msra.mxu0 %v437
    %482 = vmatprep.subr.bf16.mxu0 0
    %483 = vmatpush1.bf16.msra.mxu0 %v438
    %484 = vmatprep.subr.bf16.mxu0 0
    %485 = vmatpush1.bf16.msra.mxu0 %v439
    %486 = vmatprep.subr.bf16.mxu0 0
    %487 = vmatpush1.bf16.msra.mxu0 %v440
    %488 = vmatprep.subr.bf16.mxu0 0
    %489 = vmatpush1.bf16.msra.mxu0 %v441
    %490 = vmatprep.mubr.bf16.mxu0 %v161
    %491 = vmatmul.mubr.bf16.gmra.mrb[0].mxu0 %v160
    %v492 = vpop.f32.mrb[0].mxu0
    %v493 = vadd.f32 0.0, %v492
    %v494 = vpop.f32.mrb[0].mxu0
    %v495 = vpop.f32.mrb[0].mxu0
    %v496 = vpop.f32.mrb[0].mxu0
    %497 = vdwg.mxu0
    %v498 = vpack.c.bf16 %v325, %v325
    %v499 = vpack.c.bf16 %v493, %v493
    %v500 = vld [vmem:[%s2] sm:$0xf]
    %v501 = vld [vmem:[%s3] sm:$0xf]
    %vm502 = vcmask 31744
    %v504 = vsel %vm502, %v500, 0
    %vm506 = vcmask 1041408
    %v508 = vsel %vm506, %v498, 0
    %510 = vmatprep.subr.bf16.mxu0 0
    %511 = vmatpush1.bf16.msra.mxu0 %v508
    %512 = vmatprep.subr.bf16.mxu0 0
    %513 = vmatpush1.bf16.msra.mxu0 0
    %514 = vmatprep.subr.bf16.mxu0 0
    %515 = vmatpush1.bf16.msra.mxu0 0
    %516 = vmatprep.subr.bf16.mxu0 0
    %517 = vmatpush1.bf16.msra.mxu0 0
    %518 = vmatprep.subr.bf16.mxu0 0
    %519 = vmatpush1.bf16.msra.mxu0 0
    %520 = vmatprep.subr.bf16.mxu0 0
    %521 = vmatpush1.bf16.msra.mxu0 0
    %522 = vmatprep.subr.bf16.mxu0 0
    %523 = vmatpush1.bf16.msra.mxu0 0
    %524 = vmatprep.subr.bf16.mxu0 0
    %525 = vmatpush1.bf16.msra.mxu0 0
    %526 = vmatprep.subr.bf16.mxu0 0
    %527 = vmatpush1.bf16.msra.mxu0 0
    %528 = vmatprep.subr.bf16.mxu0 0
    %529 = vmatpush1.bf16.msra.mxu0 0
    %530 = vmatprep.subr.bf16.mxu0 0
    %531 = vmatpush1.bf16.msra.mxu0 0
    %532 = vmatprep.subr.bf16.mxu0 0
    %533 = vmatpush1.bf16.msra.mxu0 0
    %534 = vmatprep.subr.bf16.mxu0 0
    %535 = vmatpush1.bf16.msra.mxu0 0
    %536 = vmatprep.subr.bf16.mxu0 0
    %537 = vmatpush1.bf16.msra.mxu0 0
    %538 = vmatprep.subr.bf16.mxu0 0
    %539 = vmatpush1.bf16.msra.mxu0 0
    %540 = vmatprep.subr.bf16.mxu0 0
    %541 = vmatpush1.bf16.msra.mxu0 0
    %542 = vmatprep.mubr.bf16.mxu0 0
    %543 = vmatmul.mubr.bf16.gmra.mrb[0].mxu0 %v504
    %v544 = vpop.f32.mrb[0].mxu0
    %v545 = vadd.f32 0.0, %v544
    %v546 = vpop.f32.mrb[0].mxu0
    %v547 = vpop.f32.mrb[0].mxu0
    %v548 = vpop.f32.mrb[0].mxu0
    %549 = vdwg.mxu0
    %v551 = vsel %vm502, %v501, 0
    %v554 = vsel %vm506, %v499, 0
    %556 = vmatprep.subr.bf16.mxu0 0
    %557 = vmatpush1.bf16.msra.mxu0 %v554
    %558 = vmatprep.subr.bf16.mxu0 0
    %559 = vmatpush1.bf16.msra.mxu0 0
    %560 = vmatprep.subr.bf16.mxu0 0
    %561 = vmatpush1.bf16.msra.mxu0 0
    %562 = vmatprep.subr.bf16.mxu0 0
    %563 = vmatpush1.bf16.msra.mxu0 0
    %564 = vmatprep.subr.bf16.mxu0 0
    %565 = vmatpush1.bf16.msra.mxu0 0
    %566 = vmatprep.subr.bf16.mxu0 0
    %567 = vmatpush1.bf16.msra.mxu0 0
    %568 = vmatprep.subr.bf16.mxu0 0
    %569 = vmatpush1.bf16.msra.mxu0 0
    %570 = vmatprep.subr.bf16.mxu0 0
    %571 = vmatpush1.bf16.msra.mxu0 0
    %572 = vmatprep.subr.bf16.mxu0 0
    %573 = vmatpush1.bf16.msra.mxu0 0
    %574 = vmatprep.subr.bf16.mxu0 0
    %575 = vmatpush1.bf16.msra.mxu0 0
    %576 = vmatprep.subr.bf16.mxu0 0
    %577 = vmatpush1.bf16.msra.mxu0 0
    %578 = vmatprep.subr.bf16.mxu0 0
    %579 = vmatpush1.bf16.msra.mxu0 0
    %580 = vmatprep.subr.bf16.mxu0 0
    %581 = vmatpush1.bf16.msra.mxu0 0
    %582 = vmatprep.subr.bf16.mxu0 0
    %583 = vmatpush1.bf16.msra.mxu0 0
    %584 = vmatprep.subr.bf16.mxu0 0
    %585 = vmatpush1.bf16.msra.mxu0 0
    %586 = vmatprep.subr.bf16.mxu0 0
    %587 = vmatpush1.bf16.msra.mxu0 0
    %588 = vmatprep.mubr.bf16.mxu0 0
    %589 = vmatmul.mubr.bf16.gmra.mrb[0].mxu0 %v551
    %v590 = vpop.f32.mrb[0].mxu0
    %v591 = vadd.f32 0.0, %v590
    %v592 = vpop.f32.mrb[0].mxu0
    %v593 = vpop.f32.mrb[0].mxu0
    %v594 = vpop.f32.mrb[0].mxu0
    %595 = vdwg.mxu0
    %v596 = vsub.f32 %v545, %v591
    %597 = vmatprep.subr.bf16.mxu0 0
    %598 = vmatpush1.bf16.msra.mxu0 %v508
    %599 = vmatprep.subr.bf16.mxu0 0
    %600 = vmatpush1.bf16.msra.mxu0 0
    %601 = vmatprep.subr.bf16.mxu0 0
    %602 = vmatpush1.bf16.msra.mxu0 0
    %603 = vmatprep.subr.bf16.mxu0 0
    %604 = vmatpush1.bf16.msra.mxu0 0
    %605 = vmatprep.subr.bf16.mxu0 0
    %606 = vmatpush1.bf16.msra.mxu0 0
    %607 = vmatprep.subr.bf16.mxu0 0
    %608 = vmatpush1.bf16.msra.mxu0 0
    %609 = vmatprep.subr.bf16.mxu0 0
    %610 = vmatpush1.bf16.msra.mxu0 0
    %611 = vmatprep.subr.bf16.mxu0 0
    %612 = vmatpush1.bf16.msra.mxu0 0
    %613 = vmatprep.subr.bf16.mxu0 0
    %614 = vmatpush1.bf16.msra.mxu0 0
    %615 = vmatprep.subr.bf16.mxu0 0
    %616 = vmatpush1.bf16.msra.mxu0 0
    %617 = vmatprep.subr.bf16.mxu0 0
    %618 = vmatpush1.bf16.msra.mxu0 0
    %619 = vmatprep.subr.bf16.mxu0 0
    %620 = vmatpush1.bf16.msra.mxu0 0
    %621 = vmatprep.subr.bf16.mxu0 0
    %622 = vmatpush1.bf16.msra.mxu0 0
    %623 = vmatprep.subr.bf16.mxu0 0
    %624 = vmatpush1.bf16.msra.mxu0 0
    %625 = vmatprep.subr.bf16.mxu0 0
    %626 = vmatpush1.bf16.msra.mxu0 0
    %627 = vmatprep.subr.bf16.mxu0 0
    %628 = vmatpush1.bf16.msra.mxu0 0
    %629 = vmatprep.mubr.bf16.mxu0 0
    %630 = vmatmul.mubr.bf16.gmra.mrb[0].mxu0 %v551
    %v631 = vpop.f32.mrb[0].mxu0
    %v632 = vadd.f32 0.0, %v631
    %v633 = vpop.f32.mrb[0].mxu0
    %v634 = vpop.f32.mrb[0].mxu0
    %v635 = vpop.f32.mrb[0].mxu0
    %636 = vdwg.mxu0
    %637 = vmatprep.subr.bf16.mxu0 0
    %638 = vmatpush1.bf16.msra.mxu0 %v554
    %639 = vmatprep.subr.bf16.mxu0 0
    %640 = vmatpush1.bf16.msra.mxu0 0
    %641 = vmatprep.subr.bf16.mxu0 0
    %642 = vmatpush1.bf16.msra.mxu0 0
    %643 = vmatprep.subr.bf16.mxu0 0
    %644 = vmatpush1.bf16.msra.mxu0 0
    %645 = vmatprep.subr.bf16.mxu0 0
    %646 = vmatpush1.bf16.msra.mxu0 0
    %647 = vmatprep.subr.bf16.mxu0 0
    %648 = vmatpush1.bf16.msra.mxu0 0
    %649 = vmatprep.subr.bf16.mxu0 0
    %650 = vmatpush1.bf16.msra.mxu0 0
    %651 = vmatprep.subr.bf16.mxu0 0
    %652 = vmatpush1.bf16.msra.mxu0 0
    %653 = vmatprep.subr.bf16.mxu0 0
    %654 = vmatpush1.bf16.msra.mxu0 0
    %655 = vmatprep.subr.bf16.mxu0 0
    %656 = vmatpush1.bf16.msra.mxu0 0
    %657 = vmatprep.subr.bf16.mxu0 0
    %658 = vmatpush1.bf16.msra.mxu0 0
    %659 = vmatprep.subr.bf16.mxu0 0
    %660 = vmatpush1.bf16.msra.mxu0 0
    %661 = vmatprep.subr.bf16.mxu0 0
    %662 = vmatpush1.bf16.msra.mxu0 0
    %663 = vmatprep.subr.bf16.mxu0 0
    %664 = vmatpush1.bf16.msra.mxu0 0
    %665 = vmatprep.subr.bf16.mxu0 0
    %666 = vmatpush1.bf16.msra.mxu0 0
    %667 = vmatprep.subr.bf16.mxu0 0
    %668 = vmatpush1.bf16.msra.mxu0 0
    %669 = vmatprep.mubr.bf16.mxu0 0
    %670 = vmatmul.mubr.bf16.gmra.mrb[0].mxu0 %v504
    %v671 = vpop.f32.mrb[0].mxu0
    %v672 = vadd.f32 %v632, %v671
    %v673 = vpop.f32.mrb[0].mxu0
    %v674 = vpop.f32.mrb[0].mxu0
    %v675 = vpop.f32.mrb[0].mxu0
    %676 = vdwg.mxu0
    %v677 = vld [vmem:[%s6] sm:$0xff]
    %v678 = vld [vmem:[%s7] sm:$0xff]
    %v679 = vmul.f32 %v596, %v677
    %v680 = vmul.f32 %v672, %v678
    %v681 = vsub.f32 %v679, %v680
    %v682 = vmul.f32 %v596, %v678
    %v683 = vmul.f32 %v672, %v677
    %v684 = vadd.f32 %v682, %v683
    %v685 = vpack.c.bf16 %v681, %v681
    %v686 = vld [vmem:[#allocation8] sm:$0xff]
    %v687 = vld [vmem:[#allocation8 + $0x8] sm:$0xff]
    %v688 = vld [vmem:[#allocation8 + $0x10] sm:$0xff]
    %v689 = vld [vmem:[#allocation8 + $0x18] sm:$0xff]
    %v690 = vld [vmem:[#allocation8 + $0x20] sm:$0xff]
    %v691 = vld [vmem:[#allocation8 + $0x28] sm:$0xff]
    %v692 = vld [vmem:[#allocation8 + $0x30] sm:$0xff]
    %v693 = vld [vmem:[#allocation8 + $0x38] sm:$0xff]
    %v694 = vld [vmem:[#allocation8 + $0x40] sm:$0xff]
    %v695 = vld [vmem:[#allocation8 + $0x48] sm:$0xff]
    %v696 = vld [vmem:[#allocation8 + $0x50] sm:$0xff]
    %v697 = vld [vmem:[#allocation8 + $0x58] sm:$0xff]
    %v698 = vld [vmem:[#allocation8 + $0x60] sm:$0xff]
    %v699 = vld [vmem:[#allocation8 + $0x68] sm:$0xff]
    %v700 = vld [vmem:[#allocation8 + $0x70] sm:$0xff]
    %v701 = vld [vmem:[#allocation8 + $0x78] sm:$0xff]
    %v718 = vunpack.c.l.b16 %v686
    %v719 = vunpack.c.h.b16 %v686
    %v720 = vunpack.c.l.b16 %v687
    %v721 = vunpack.c.h.b16 %v687
    %v722 = vunpack.c.l.b16 %v688
    %v723 = vunpack.c.h.b16 %v688
    %v724 = vunpack.c.l.b16 %v689
    %v725 = vunpack.c.h.b16 %v689
    %v726 = vunpack.c.l.b16 %v690
    %v727 = vunpack.c.h.b16 %v690
    %v728 = vunpack.c.l.b16 %v691
    %v729 = vunpack.c.h.b16 %v691
    %v730 = vunpack.c.l.b16 %v692
    %v731 = vunpack.c.h.b16 %v692
    %v732 = vunpack.c.l.b16 %v693
    %v733 = vunpack.c.h.b16 %v693
    %v734 = vunpack.c.l.b16 %v694
    %v735 = vunpack.c.h.b16 %v694
    %v736 = vunpack.c.l.b16 %v695
    %v737 = vunpack.c.h.b16 %v695
    %v738 = vunpack.c.l.b16 %v696
    %v739 = vunpack.c.h.b16 %v696
    %v740 = vunpack.c.l.b16 %v697
    %v741 = vunpack.c.h.b16 %v697
    %v742 = vunpack.c.l.b16 %v698
    %v743 = vunpack.c.h.b16 %v698
    %v744 = vunpack.c.l.b16 %v699
    %v745 = vunpack.c.h.b16 %v699
    %v746 = vunpack.c.l.b16 %v700
    %v747 = vunpack.c.h.b16 %v700
    %v748 = vunpack.c.l.b16 %v701
    %v749 = vunpack.c.h.b16 %v701
    %v750 = vpack.c.b16 %v720, %v718
    %v751 = vpack.c.b16 %v721, %v719
    %v752 = vpack.c.b16 %v724, %v722
    %v753 = vpack.c.b16 %v725, %v723
    %v754 = vpack.c.b16 %v728, %v726
    %v755 = vpack.c.b16 %v729, %v727
    %v756 = vpack.c.b16 %v732, %v730
    %v757 = vpack.c.b16 %v733, %v731
    %v758 = vpack.c.b16 %v736, %v734
    %v759 = vpack.c.b16 %v737, %v735
    %v760 = vpack.c.b16 %v740, %v738
    %v761 = vpack.c.b16 %v741, %v739
    %v762 = vpack.c.b16 %v744, %v742
    %v763 = vpack.c.b16 %v745, %v743
    %v764 = vpack.c.b16 %v748, %v746
    %v765 = vpack.c.b16 %v749, %v747
    %782 = vmatprep.subr.bf16.mxu0 %v751
    %783 = vmatpush1.bf16.msra.mxu0 %v750
    %784 = vmatprep.subr.bf16.mxu0 %v753
    %785 = vmatpush1.bf16.msra.mxu0 %v752
    %786 = vmatprep.subr.bf16.mxu0 %v755
    %787 = vmatpush1.bf16.msra.mxu0 %v754
    %788 = vmatprep.subr.bf16.mxu0 %v757
    %789 = vmatpush1.bf16.msra.mxu0 %v756
    %790 = vmatprep.subr.bf16.mxu0 %v759
    %791 = vmatpush1.bf16.msra.mxu0 %v758
    %792 = vmatprep.subr.bf16.mxu0 %v761
    %793 = vmatpush1.bf16.msra.mxu0 %v760
    %794 = vmatprep.subr.bf16.mxu0 %v763
    %795 = vmatpush1.bf16.msra.mxu0 %v762
    %796 = vmatprep.subr.bf16.mxu0 %v765
    %797 = vmatpush1.bf16.msra.mxu0 %v764
    %798 = vmatprep.subr.bf16.mxu0 0
    %799 = vmatpush1.bf16.msra.mxu0 0
    %800 = vmatprep.subr.bf16.mxu0 0
    %801 = vmatpush1.bf16.msra.mxu0 0
    %802 = vmatprep.subr.bf16.mxu0 0
    %803 = vmatpush1.bf16.msra.mxu0 0
    %804 = vmatprep.subr.bf16.mxu0 0
    %805 = vmatpush1.bf16.msra.mxu0 0
    %806 = vmatprep.subr.bf16.mxu0 0
    %807 = vmatpush1.bf16.msra.mxu0 0
    %808 = vmatprep.subr.bf16.mxu0 0
    %809 = vmatpush1.bf16.msra.mxu0 0
    %810 = vmatprep.subr.bf16.mxu0 0
    %811 = vmatpush1.bf16.msra.mxu0 0
    %812 = vmatprep.subr.bf16.mxu0 0
    %813 = vmatpush1.bf16.msra.mxu0 0
    %814 = vmatprep.mubr.bf16.mxu0 0
    %815 = vmatmul.mubr.bf16.gmra.mrb[0].mxu0 %v685
    %v816 = vpop.f32.mrb[0].mxu0
    %v817 = vadd.f32 0.0, %v816
    %v818 = vpop.f32.mrb[0].mxu0
    %v819 = vadd.f32 0.0, %v818
    %v820 = vpop.f32.mrb[0].mxu0
    %v821 = vpop.f32.mrb[0].mxu0
    %822 = vdwg.mxu0
    %v823 = vpack.c.bf16 %v684, %v684
    %v824 = vld [vmem:[#allocation10] sm:$0xff]
    %v825 = vld [vmem:[#allocation10 + $0x8] sm:$0xff]
    %v826 = vld [vmem:[#allocation10 + $0x10] sm:$0xff]
    %v827 = vld [vmem:[#allocation10 + $0x18] sm:$0xff]
    %v828 = vld [vmem:[#allocation10 + $0x20] sm:$0xff]
    %v829 = vld [vmem:[#allocation10 + $0x28] sm:$0xff]
    %v830 = vld [vmem:[#allocation10 + $0x30] sm:$0xff]
    %v831 = vld [vmem:[#allocation10 + $0x38] sm:$0xff]
    %v832 = vld [vmem:[#allocation10 + $0x40] sm:$0xff]
    %v833 = vld [vmem:[#allocation10 + $0x48] sm:$0xff]
    %v834 = vld [vmem:[#allocation10 + $0x50] sm:$0xff]
    %v835 = vld [vmem:[#allocation10 + $0x58] sm:$0xff]
    %v836 = vld [vmem:[#allocation10 + $0x60] sm:$0xff]
    %v837 = vld [vmem:[#allocation10 + $0x68] sm:$0xff]
    %v838 = vld [vmem:[#allocation10 + $0x70] sm:$0xff]
    %v839 = vld [vmem:[#allocation10 + $0x78] sm:$0xff]
    %v856 = vunpack.c.l.b16 %v824
    %v857 = vunpack.c.h.b16 %v824
    %v858 = vunpack.c.l.b16 %v825
    %v859 = vunpack.c.h.b16 %v825
    %v860 = vunpack.c.l.b16 %v826
    %v861 = vunpack.c.h.b16 %v826
    %v862 = vunpack.c.l.b16 %v827
    %v863 = vunpack.c.h.b16 %v827
    %v864 = vunpack.c.l.b16 %v828
    %v865 = vunpack.c.h.b16 %v828
    %v866 = vunpack.c.l.b16 %v829
    %v867 = vunpack.c.h.b16 %v829
    %v868 = vunpack.c.l.b16 %v830
    %v869 = vunpack.c.h.b16 %v830
    %v870 = vunpack.c.l.b16 %v831
    %v871 = vunpack.c.h.b16 %v831
    %v872 = vunpack.c.l.b16 %v832
    %v873 = vunpack.c.h.b16 %v832
    %v874 = vunpack.c.l.b16 %v833
    %v875 = vunpack.c.h.b16 %v833
    %v876 = vunpack.c.l.b16 %v834
    %v877 = vunpack.c.h.b16 %v834
    %v878 = vunpack.c.l.b16 %v835
    %v879 = vunpack.c.h.b16 %v835
    %v880 = vunpack.c.l.b16 %v836
    %v881 = vunpack.c.h.b16 %v836
    %v882 = vunpack.c.l.b16 %v837
    %v883 = vunpack.c.h.b16 %v837
    %v884 = vunpack.c.l.b16 %v838
    %v885 = vunpack.c.h.b16 %v838
    %v886 = vunpack.c.l.b16 %v839
    %v887 = vunpack.c.h.b16 %v839
    %v888 = vpack.c.b16 %v858, %v856
    %v889 = vpack.c.b16 %v859, %v857
    %v890 = vpack.c.b16 %v862, %v860
    %v891 = vpack.c.b16 %v863, %v861
    %v892 = vpack.c.b16 %v866, %v864
    %v893 = vpack.c.b16 %v867, %v865
    %v894 = vpack.c.b16 %v870, %v868
    %v895 = vpack.c.b16 %v871, %v869
    %v896 = vpack.c.b16 %v874, %v872
    %v897 = vpack.c.b16 %v875, %v873
    %v898 = vpack.c.b16 %v878, %v876
    %v899 = vpack.c.b16 %v879, %v877
    %v900 = vpack.c.b16 %v882, %v880
    %v901 = vpack.c.b16 %v883, %v881
    %v902 = vpack.c.b16 %v886, %v884
    %v903 = vpack.c.b16 %v887, %v885
    %920 = vmatprep.subr.bf16.mxu0 %v889
    %921 = vmatpush1.bf16.msra.mxu0 %v888
    %922 = vmatprep.subr.bf16.mxu0 %v891
    %923 = vmatpush1.bf16.msra.mxu0 %v890
    %924 = vmatprep.subr.bf16.mxu0 %v893
    %925 = vmatpush1.bf16.msra.mxu0 %v892
    %926 = vmatprep.subr.bf16.mxu0 %v895
    %927 = vmatpush1.bf16.msra.mxu0 %v894
    %928 = vmatprep.subr.bf16.mxu0 %v897
    %929 = vmatpush1.bf16.msra.mxu0 %v896
    %930 = vmatprep.subr.bf16.mxu0 %v899
    %931 = vmatpush1.bf16.msra.mxu0 %v898
    %932 = vmatprep.subr.bf16.mxu0 %v901
    %933 = vmatpush1.bf16.msra.mxu0 %v900
    %934 = vmatprep.subr.bf16.mxu0 %v903
    %935 = vmatpush1.bf16.msra.mxu0 %v902
    %936 = vmatprep.subr.bf16.mxu0 0
    %937 = vmatpush1.bf16.msra.mxu0 0
    %938 = vmatprep.subr.bf16.mxu0 0
    %939 = vmatpush1.bf16.msra.mxu0 0
    %940 = vmatprep.subr.bf16.mxu0 0
    %941 = vmatpush1.bf16.msra.mxu0 0
    %942 = vmatprep.subr.bf16.mxu0 0
    %943 = vmatpush1.bf16.msra.mxu0 0
    %944 = vmatprep.subr.bf16.mxu0 0
    %945 = vmatpush1.bf16.msra.mxu0 0
    %946 = vmatprep.subr.bf16.mxu0 0
    %947 = vmatpush1.bf16.msra.mxu0 0
    %948 = vmatprep.subr.bf16.mxu0 0
    %949 = vmatpush1.bf16.msra.mxu0 0
    %950 = vmatprep.subr.bf16.mxu0 0
    %951 = vmatpush1.bf16.msra.mxu0 0
    %952 = vmatprep.mubr.bf16.mxu0 0
    %953 = vmatmul.mubr.bf16.gmra.mrb[0].mxu0 %v823
    %v954 = vpop.f32.mrb[0].mxu0
    %v955 = vadd.f32 0.0, %v954
    %v956 = vpop.f32.mrb[0].mxu0
    %v957 = vadd.f32 0.0, %v956
    %v958 = vpop.f32.mrb[0].mxu0
    %v959 = vpop.f32.mrb[0].mxu0
    %960 = vdwg.mxu0
    %v961 = vsub.f32 %v817, %v955
    %v962 = vsub.f32 %v819, %v957
    %963 = vst [vmem:[#allocation11] sm:$0xff] %v961
    %964 = vst [vmem:[#allocation11 + $0x8] sm:$0xff] %v962
    // Predicated region
    $region62: #{tpu_custom_call.1} parent=1 // pred_check
      _
    $region63: #{tpu_custom_call.1} parent=1 // pred_check_branch
      %966 = sbr.rel (0) target = $region65
    $region64: #{tpu_custom_call.1} parent=1 // pred_region
      %s968 = ssub.s32 256, 256
      %969 = vsyncadd [#allocation4], %s968
      %s971 = sshll.u32 [#allocation11], 4
      %s972 = int_to_ptr.vmem [resolvable:$true] %s971
      %974 = dma.vmem_to_hbm [thread:$0]  %s972, 256, %s10, [#allocation4]
    $region65: #{tpu_custom_call.1} parent=1 // pred_fallthru
      _
    // Predicated region
    $region66: #{tpu_custom_call.1} parent=1 // pred_check
      _
    $region67: #{tpu_custom_call.1} parent=1 // pred_check_branch
      %976 = sbr.rel (0) target = $region69
    $region68: #{tpu_custom_call.1} parent=1 // pred_region
      %977 = dma.done [#allocation4], 256
    $region69: #{tpu_custom_call.1} parent=1 // pred_fallthru
      _
    %978 = vsyncpa [#allocation3], 1
    %979 = vsyncpa [#allocation6], 1
    %980 = vsyncpa [#allocation9], 1
    %981 = vsyncpa [#allocation4], 1

// kernel: tpu_custom_call.1
$region0: #{tpu_custom_call.1}
  #allocation0 [shape = 'u32[]', space=smem, size = 0x4, offset = 0x4, fixed_abs, tag = 'smem constant byte address 0x4 - core index']
  #allocation1 [shape = 'u32[144,128]{1,0:T(1,128)}', space=vmem, size = 0x12000, scoped, tag = 'internal scratch']
  %s0 = inlined_call_operand.hbm [shape: f32[8,256], index: 0, kind: input, shape index: {}]
  %s1 = inlined_call_operand.vmem [shape: bf16[4,8], index: 1, kind: input, shape index: {}]
  %s2 = inlined_call_operand.vmem [shape: bf16[8,4], index: 2, kind: input, shape index: {}]
  %s3 = inlined_call_operand.vmem [shape: bf16[8,4], index: 3, kind: input, shape index: {}]
  %s4 = inlined_call_operand.hbm [shape: bf16[256,128], index: 4, kind: input, shape index: {}]
  %s5 = inlined_call_operand.hbm [shape: bf16[256,128], index: 5, kind: input, shape index: {}]
  %s6 = inlined_call_operand.vmem [shape: f32[8,128], index: 6, kind: input, shape index: {}]
  %s7 = inlined_call_operand.vmem [shape: f32[8,128], index: 7, kind: input, shape index: {}]
  %s8 = inlined_call_operand.hbm [shape: bf16[128,256], index: 8, kind: input, shape index: {}]
  %s9 = inlined_call_operand.hbm [shape: bf16[128,256], index: 9, kind: input, shape index: {}]
  %s10 = inlined_call_operand.hbm [shape: f32[8,256], index: 10, kind: output, shape index: {}]
  %s11 = sld [smem:[#allocation0]]
  $region70: #{tpu_custom_call.1} parent=0
    _
  %s13 = ssub.s32 1, %s11
  %s14 = scalar_select 0, %s13, %s11
  $region1: #{tpu_custom_call.1} parent=0
    #allocation2 [shape = 'u8[8192]{0}', space=vmem, size = 0x2000, scoped, tag = 'input window, operand 0, single buffered']
    #allocation3 [shape = 's32[1]{0}', space=sflag, size = 0x4, scoped, tag = 'scoped memory for tpu_custom_call.1']
    #allocation4 [shape = 's32[1]{0}', space=sflag, size = 0x4, scoped, tag = 'scoped memory for tpu_custom_call.1']
    #allocation5 [shape = 'u8[65536]{0}', space=vmem, size = 0x10000, scoped, tag = 'input window, operand 4, single buffered']
    #allocation6 [shape = 's32[1]{0}', space=sflag, size = 0x4, scoped, tag = 'scoped memory for tpu_custom_call.1']
    #allocation7 [shape = 'u8[65536]{0}', space=vmem, size = 0x10000, scoped, tag = 'input window, operand 5, single buffered']
    #allocation8 [shape = 'u8[65536]{0}', space=vmem, size = 0x10000, scoped, tag = 'input window, operand 8, single buffered']
    #allocation9 [shape = 's32[1]{0}', space=sflag, size = 0x4, scoped, tag = 'scoped memory for tpu_custom_call.1']
    #allocation10 [shape = 'u8[65536]{0}', space=vmem, size = 0x10000, scoped, tag = 'input window, operand 9, single buffered']
    #allocation11 [shape = 'u8[8192]{0}', space=vmem, size = 0x2000, scoped, tag = 'output window, operand 0, single buffered']
    %15 = vsyncpa [#allocation3], 0
    %16 = vsyncpa [#allocation6], 0
    %17 = vsyncpa [#allocation9], 0
    %18 = vsyncpa [#allocation4], 0
    // Predicated region
    $region2: #{tpu_custom_call.1} parent=1 // pred_check
      _
    $region3: #{tpu_custom_call.1} parent=1 // pred_check_branch
      %20 = sbr.rel (0) target = $region5
    $region4: #{tpu_custom_call.1} parent=1 // pred_region
      %s22 = ssub.s32 256, 256
      %23 = vsyncadd [#allocation3], %s22
      %s25 = sshll.u32 [#allocation2], 4
      %s26 = int_to_ptr.vmem [resolvable:$true] %s25
      %28 = dma.hbm_to_vmem [thread:$0]  %s0, 256, %s26, [#allocation3]
    $region5: #{tpu_custom_call.1} parent=1 // pred_fallthru
      _
    // Predicated region
    $region6: #{tpu_custom_call.1} parent=1 // pred_check
      _
    $region7: #{tpu_custom_call.1} parent=1 // pred_check_branch
      %30 = sbr.rel (0) target = $region9
    $region8: #{tpu_custom_call.1} parent=1 // pred_region
      _
    $region9: #{tpu_custom_call.1} parent=1 // pred_fallthru
      _
    // Predicated region
    $region10: #{tpu_custom_call.1} parent=1 // pred_check
      _
    $region11: #{tpu_custom_call.1} parent=1 // pred_check_branch
      %32 = sbr.rel (0) target = $region13
    $region12: #{tpu_custom_call.1} parent=1 // pred_region
      _
    $region13: #{tpu_custom_call.1} parent=1 // pred_fallthru
      _
    // Predicated region
    $region14: #{tpu_custom_call.1} parent=1 // pred_check
      _
    $region15: #{tpu_custom_call.1} parent=1 // pred_check_branch
      %34 = sbr.rel (0) target = $region17
    $region16: #{tpu_custom_call.1} parent=1 // pred_region
      _
    $region17: #{tpu_custom_call.1} parent=1 // pred_fallthru
      _
    // Predicated region
    $region18: #{tpu_custom_call.1} parent=1 // pred_check
      _
    $region19: #{tpu_custom_call.1} parent=1 // pred_check_branch
      %36 = sbr.rel (0) target = $region21
    $region20: #{tpu_custom_call.1} parent=1 // pred_region
      %s38 = ssub.s32 2048, 2048
      %39 = vsyncadd [#allocation6], %s38
      %s40 = sshll.u32 [#allocation5], 4
      %s41 = int_to_ptr.vmem [resolvable:$true] %s40
      %46 = dma.hbm_to_vmem [thread:$0]  %s4, 2048, %s41, [#allocation6], 64, 64, 4
    $region21: #{tpu_custom_call.1} parent=1 // pred_fallthru
      _
    // Predicated region
    $region22: #{tpu_custom_call.1} parent=1 // pred_check
      _
    $region23: #{tpu_custom_call.1} parent=1 // pred_check_branch
      %48 = sbr.rel (0) target = $region25
    $region24: #{tpu_custom_call.1} parent=1 // pred_region
      %s50 = ssub.s32 2048, 2048
      %51 = vsyncadd [#allocation6], %s50
      %s52 = sshll.u32 [#allocation7], 4
      %s53 = int_to_ptr.vmem [resolvable:$true] %s52
      %58 = dma.hbm_to_vmem [thread:$0]  %s5, 2048, %s53, [#allocation6], 64, 64, 4
    $region25: #{tpu_custom_call.1} parent=1 // pred_fallthru
      _
    // Predicated region
    $region26: #{tpu_custom_call.1} parent=1 // pred_check
      _
    $region27: #{tpu_custom_call.1} parent=1 // pred_check_branch
      %60 = sbr.rel (0) target = $region29
    $region28: #{tpu_custom_call.1} parent=1 // pred_region
      _
    $region29: #{tpu_custom_call.1} parent=1 // pred_fallthru
      _
    // Predicated region
    $region30: #{tpu_custom_call.1} parent=1 // pred_check
      _
    $region31: #{tpu_custom_call.1} parent=1 // pred_check_branch
      %62 = sbr.rel (0) target = $region33
    $region32: #{tpu_custom_call.1} parent=1 // pred_region
      _
    $region33: #{tpu_custom_call.1} parent=1 // pred_fallthru
      _
    // Predicated region
    $region34: #{tpu_custom_call.1} parent=1 // pred_check
      _
    $region35: #{tpu_custom_call.1} parent=1 // pred_check_branch
      %64 = sbr.rel (0) target = $region37
    $region36: #{tpu_custom_call.1} parent=1 // pred_region
      %s66 = ssub.s32 2048, 2048
      %67 = vsyncadd [#allocation9], %s66
      %s68 = sshll.u32 [#allocation8], 4
      %s69 = int_to_ptr.vmem [resolvable:$true] %s68
      %74 = dma.hbm_to_vmem [thread:$0]  %s8, 2048, %s69, [#allocation9], 128, 128, 8
    $region37: #{tpu_custom_call.1} parent=1 // pred_fallthru
      _
    // Predicated region
    $region38: #{tpu_custom_call.1} parent=1 // pred_check
      _
    $region39: #{tpu_custom_call.1} parent=1 // pred_check_branch
      %76 = sbr.rel (0) target = $region41
    $region40: #{tpu_custom_call.1} parent=1 // pred_region
      %s78 = ssub.s32 2048, 2048
      %79 = vsyncadd [#allocation9], %s78
      %s80 = sshll.u32 [#allocation10], 4
      %s81 = int_to_ptr.vmem [resolvable:$true] %s80
      %86 = dma.hbm_to_vmem [thread:$0]  %s9, 2048, %s81, [#allocation9], 128, 128, 8
    $region41: #{tpu_custom_call.1} parent=1 // pred_fallthru
      _
    // Predicated region
    $region42: #{tpu_custom_call.1} parent=1 // pred_check
      _
    $region43: #{tpu_custom_call.1} parent=1 // pred_check_branch
      %88 = sbr.rel (0) target = $region45
    $region44: #{tpu_custom_call.1} parent=1 // pred_region
      %89 = dma.done [#allocation3], 256
    $region45: #{tpu_custom_call.1} parent=1 // pred_fallthru
      _
    // Predicated region
    $region46: #{tpu_custom_call.1} parent=1 // pred_check
      _
    $region47: #{tpu_custom_call.1} parent=1 // pred_check_branch
      %91 = sbr.rel (0) target = $region49
    $region48: #{tpu_custom_call.1} parent=1 // pred_region
      %92 = dma.done [#allocation6], 2048
    $region49: #{tpu_custom_call.1} parent=1 // pred_fallthru
      _
    // Predicated region
    $region50: #{tpu_custom_call.1} parent=1 // pred_check
      _
    $region51: #{tpu_custom_call.1} parent=1 // pred_check_branch
      %94 = sbr.rel (0) target = $region53
    $region52: #{tpu_custom_call.1} parent=1 // pred_region
      %95 = dma.done [#allocation6], 2048
    $region53: #{tpu_custom_call.1} parent=1 // pred_fallthru
      _
    // Predicated region
    $region54: #{tpu_custom_call.1} parent=1 // pred_check
      _
    $region55: #{tpu_custom_call.1} parent=1 // pred_check_branch
      %97 = sbr.rel (0) target = $region57
    $region56: #{tpu_custom_call.1} parent=1 // pred_region
      %98 = dma.done [#allocation9], 2048
    $region57: #{tpu_custom_call.1} parent=1 // pred_fallthru
      _
    // Predicated region
    $region58: #{tpu_custom_call.1} parent=1 // pred_check
      _
    $region59: #{tpu_custom_call.1} parent=1 // pred_check_branch
      %100 = sbr.rel (0) target = $region61
    $region60: #{tpu_custom_call.1} parent=1 // pred_region
      %101 = dma.done [#allocation9], 2048
    $region61: #{tpu_custom_call.1} parent=1 // pred_fallthru
      _
    %v103 = vld [vmem:[%s1] sm:$0x3]
    %v104 = vld [vmem:[#allocation2] sm:$0xff]
    %v105 = vld [vmem:[#allocation2 + $0x8] sm:$0xff]
    %v106 = vpack.c.bf16 %v104, %v104
    %v107 = vpack.c.bf16 %v105, %v105
    %vm108 = vcmask 64512
    %v110 = vsel %vm108, %v103, 0
    %vm112 = vcmask 1043456
    %v114 = vsel %vm112, %v106, 0
    %v117 = vsel %vm112, %v107, 0
    %119 = vmatprep.subr.bf16.mxu0 %v117
    %120 = vmatpush1.bf16.msra.mxu0 %v114
    %121 = vmatprep.subr.bf16.mxu0 0
    %122 = vmatpush1.bf16.msra.mxu0 0
    %123 = vmatprep.subr.bf16.mxu0 0
    %124 = vmatpush1.bf16.msra.mxu0 0
    %125 = vmatprep.subr.bf16.mxu0 0
    %126 = vmatpush1.bf16.msra.mxu0 0
    %127 = vmatprep.subr.bf16.mxu0 0
    %128 = vmatpush1.bf16.msra.mxu0 0
    %129 = vmatprep.subr.bf16.mxu0 0
    %130 = vmatpush1.bf16.msra.mxu0 0
    %131 = vmatprep.subr.bf16.mxu0 0
    %132 = vmatpush1.bf16.msra.mxu0 0
    %133 = vmatprep.subr.bf16.mxu0 0
    %134 = vmatpush1.bf16.msra.mxu0 0
    %135 = vmatprep.subr.bf16.mxu0 0
    %136 = vmatpush1.bf16.msra.mxu0 0
    %137 = vmatprep.subr.bf16.mxu0 0
    %138 = vmatpush1.bf16.msra.mxu0 0
    %139 = vmatprep.subr.bf16.mxu0 0
    %140 = vmatpush1.bf16.msra.mxu0 0
    %141 = vmatprep.subr.bf16.mxu0 0
    %142 = vmatpush1.bf16.msra.mxu0 0
    %143 = vmatprep.subr.bf16.mxu0 0
    %144 = vmatpush1.bf16.msra.mxu0 0
    %145 = vmatprep.subr.bf16.mxu0 0
    %146 = vmatpush1.bf16.msra.mxu0 0
    %147 = vmatprep.subr.bf16.mxu0 0
    %148 = vmatpush1.bf16.msra.mxu0 0
    %149 = vmatprep.subr.bf16.mxu0 0
    %150 = vmatpush1.bf16.msra.mxu0 0
    %151 = vmatprep.mubr.bf16.mxu0 0
    %152 = vmatmul.mubr.bf16.gmra.mrb[0].mxu0 %v110
    %v153 = vpop.f32.mrb[0].mxu0
    %v154 = vadd.f32 0.0, %v153
    %v155 = vpop.f32.mrb[0].mxu0
    %v156 = vadd.f32 0.0, %v155
    %v157 = vpop.f32.mrb[0].mxu0
    %v158 = vpop.f32.mrb[0].mxu0
    %159 = vdwg.mxu0
    %v160 = vpack.c.bf16 %v154, %v154
    %v161 = vpack.c.bf16 %v156, %v156
    %v162 = vld [vmem:[#allocation5] sm:$0xf]
    %v163 = vld [vmem:[#allocation5 + $0x4] sm:$0xf]
    %v164 = vld [vmem:[#allocation5 + $0x8] sm:$0xf]
    %v165 = vld [vmem:[#allocation5 + $0xc] sm:$0xf]
    %v166 = vld [vmem:[#allocation5 + $0x10] sm:$0xf]
    %v167 = vld [vmem:[#allocation5 + $0x14] sm:$0xf]
    %v168 = vld [vmem:[#allocation5 + $0x18] sm:$0xf]
    %v169 = vld [vmem:[#allocation5 + $0x1c] sm:$0xf]
    %v170 = vld [vmem:[#allocation5 + $0x20] sm:$0xf]
    %v171 = vld [vmem:[#allocation5 + $0x24] sm:$0xf]
    %v172 = vld [vmem:[#allocation5 + $0x28] sm:$0xf]
    %v173 = vld [vmem:[#allocation5 + $0x2c] sm:$0xf]
    %v174 = vld [vmem:[#allocation5 + $0x30] sm:$0xf]
    %v175 = vld [vmem:[#allocation5 + $0x34] sm:$0xf]
    %v176 = vld [vmem:[#allocation5 + $0x38] sm:$0xf]
    %v177 = vld [vmem:[#allocation5 + $0x3c] sm:$0xf]
    %v178 = vld [vmem:[#allocation5 + $0x40] sm:$0xf]
    %v179 = vld [vmem:[#allocation5 + $0x44] sm:$0xf]
    %v180 = vld [vmem:[#allocation5 + $0x48] sm:$0xf]
    %v181 = vld [vmem:[#allocation5 + $0x4c] sm:$0xf]
    %v182 = vld [vmem:[#allocation5 + $0x50] sm:$0xf]
    %v183 = vld [vmem:[#allocation5 + $0x54] sm:$0xf]
    %v184 = vld [vmem:[#allocation5 + $0x58] sm:$0xf]
    %v185 = vld [vmem:[#allocation5 + $0x5c] sm:$0xf]
    %v186 = vld [vmem:[#allocation5 + $0x60] sm:$0xf]
    %v187 = vld [vmem:[#allocation5 + $0x64] sm:$0xf]
    %v188 = vld [vmem:[#allocation5 + $0x68] sm:$0xf]
    %v189 = vld [vmem:[#allocation5 + $0x6c] sm:$0xf]
    %v190 = vld [vmem:[#allocation5 + $0x70] sm:$0xf]
    %v191 = vld [vmem:[#allocation5 + $0x74] sm:$0xf]
    %v192 = vld [vmem:[#allocation5 + $0x78] sm:$0xf]
    %v193 = vld [vmem:[#allocation5 + $0x7c] sm:$0xf]
    %v226 = vunpack.c.l.b16 %v162
    %v227 = vunpack.c.l.b16 %v163
    %v228 = vunpack.c.l.b16 %v164
    %v229 = vunpack.c.l.b16 %v165
    %v230 = vunpack.c.l.b16 %v166
    %v231 = vunpack.c.l.b16 %v167
    %v232 = vunpack.c.l.b16 %v168
    %v233 = vunpack.c.l.b16 %v169
    %v234 = vunpack.c.l.b16 %v170
    %v235 = vunpack.c.l.b16 %v171
    %v236 = vunpack.c.l.b16 %v172
    %v237 = vunpack.c.l.b16 %v173
    %v238 = vunpack.c.l.b16 %v174
    %v239 = vunpack.c.l.b16 %v175
    %v240 = vunpack.c.l.b16 %v176
    %v241 = vunpack.c.l.b16 %v177
    %v242 = vunpack.c.l.b16 %v178
    %v243 = vunpack.c.l.b16 %v179
    %v244 = vunpack.c.l.b16 %v180
    %v245 = vunpack.c.l.b16 %v181
    %v246 = vunpack.c.l.b16 %v182
    %v247 = vunpack.c.l.b16 %v183
    %v248 = vunpack.c.l.b16 %v184
    %v249 = vunpack.c.l.b16 %v185
    %v250 = vunpack.c.l.b16 %v186
    %v251 = vunpack.c.l.b16 %v187
    %v252 = vunpack.c.l.b16 %v188
    %v253 = vunpack.c.l.b16 %v189
    %v254 = vunpack.c.l.b16 %v190
    %v255 = vunpack.c.l.b16 %v191
    %v256 = vunpack.c.l.b16 %v192
    %v257 = vunpack.c.l.b16 %v193
    %v258 = vpack.c.b16 %v227, %v226
    %v259 = vpack.c.b16 %v229, %v228
    %v260 = vpack.c.b16 %v231, %v230
    %v261 = vpack.c.b16 %v233, %v232
    %v262 = vpack.c.b16 %v235, %v234
    %v263 = vpack.c.b16 %v237, %v236
    %v264 = vpack.c.b16 %v239, %v238
    %v265 = vpack.c.b16 %v241, %v240
    %v266 = vpack.c.b16 %v243, %v242
    %v267 = vpack.c.b16 %v245, %v244
    %v268 = vpack.c.b16 %v247, %v246
    %v269 = vpack.c.b16 %v249, %v248
    %v270 = vpack.c.b16 %v251, %v250
    %v271 = vpack.c.b16 %v253, %v252
    %v272 = vpack.c.b16 %v255, %v254
    %v273 = vpack.c.b16 %v257, %v256
    %290 = vmatprep.subr.bf16.mxu0 0
    %291 = vmatpush1.bf16.msra.mxu0 %v258
    %292 = vmatprep.subr.bf16.mxu0 0
    %293 = vmatpush1.bf16.msra.mxu0 %v259
    %294 = vmatprep.subr.bf16.mxu0 0
    %295 = vmatpush1.bf16.msra.mxu0 %v260
    %296 = vmatprep.subr.bf16.mxu0 0
    %297 = vmatpush1.bf16.msra.mxu0 %v261
    %298 = vmatprep.subr.bf16.mxu0 0
    %299 = vmatpush1.bf16.msra.mxu0 %v262
    %300 = vmatprep.subr.bf16.mxu0 0
    %301 = vmatpush1.bf16.msra.mxu0 %v263
    %302 = vmatprep.subr.bf16.mxu0 0
    %303 = vmatpush1.bf16.msra.mxu0 %v264
    %304 = vmatprep.subr.bf16.mxu0 0
    %305 = vmatpush1.bf16.msra.mxu0 %v265
    %306 = vmatprep.subr.bf16.mxu0 0
    %307 = vmatpush1.bf16.msra.mxu0 %v266
    %308 = vmatprep.subr.bf16.mxu0 0
    %309 = vmatpush1.bf16.msra.mxu0 %v267
    %310 = vmatprep.subr.bf16.mxu0 0
    %311 = vmatpush1.bf16.msra.mxu0 %v268
    %312 = vmatprep.subr.bf16.mxu0 0
    %313 = vmatpush1.bf16.msra.mxu0 %v269
    %314 = vmatprep.subr.bf16.mxu0 0
    %315 = vmatpush1.bf16.msra.mxu0 %v270
    %316 = vmatprep.subr.bf16.mxu0 0
    %317 = vmatpush1.bf16.msra.mxu0 %v271
    %318 = vmatprep.subr.bf16.mxu0 0
    %319 = vmatpush1.bf16.msra.mxu0 %v272
    %320 = vmatprep.subr.bf16.mxu0 0
    %321 = vmatpush1.bf16.msra.mxu0 %v273
    %322 = vmatprep.mubr.bf16.mxu0 %v161
    %323 = vmatmul.mubr.bf16.gmra.mrb[0].mxu0 %v160
    %v324 = vpop.f32.mrb[0].mxu0
    %v325 = vadd.f32 0.0, %v324
    %v326 = vpop.f32.mrb[0].mxu0
    %v327 = vpop.f32.mrb[0].mxu0
    %v328 = vpop.f32.mrb[0].mxu0
    %329 = vdwg.mxu0
    %v330 = vld [vmem:[#allocation7] sm:$0xf]
    %v331 = vld [vmem:[#allocation7 + $0x4] sm:$0xf]
    %v332 = vld [vmem:[#allocation7 + $0x8] sm:$0xf]
    %v333 = vld [vmem:[#allocation7 + $0xc] sm:$0xf]
    %v334 = vld [vmem:[#allocation7 + $0x10] sm:$0xf]
    %v335 = vld [vmem:[#allocation7 + $0x14] sm:$0xf]
    %v336 = vld [vmem:[#allocation7 + $0x18] sm:$0xf]
    %v337 = vld [vmem:[#allocation7 + $0x1c] sm:$0xf]
    %v338 = vld [vmem:[#allocation7 + $0x20] sm:$0xf]
    %v339 = vld [vmem:[#allocation7 + $0x24] sm:$0xf]
    %v340 = vld [vmem:[#allocation7 + $0x28] sm:$0xf]
    %v341 = vld [vmem:[#allocation7 + $0x2c] sm:$0xf]
    %v342 = vld [vmem:[#allocation7 + $0x30] sm:$0xf]
    %v343 = vld [vmem:[#allocation7 + $0x34] sm:$0xf]
    %v344 = vld [vmem:[#allocation7 + $0x38] sm:$0xf]
    %v345 = vld [vmem:[#allocation7 + $0x3c] sm:$0xf]
    %v346 = vld [vmem:[#allocation7 + $0x40] sm:$0xf]
    %v347 = vld [vmem:[#allocation7 + $0x44] sm:$0xf]
    %v348 = vld [vmem:[#allocation7 + $0x48] sm:$0xf]
    %v349 = vld [vmem:[#allocation7 + $0x4c] sm:$0xf]
    %v350 = vld [vmem:[#allocation7 + $0x50] sm:$0xf]
    %v351 = vld [vmem:[#allocation7 + $0x54] sm:$0xf]
    %v352 = vld [vmem:[#allocation7 + $0x58] sm:$0xf]
    %v353 = vld [vmem:[#allocation7 + $0x5c] sm:$0xf]
    %v354 = vld [vmem:[#allocation7 + $0x60] sm:$0xf]
    %v355 = vld [vmem:[#allocation7 + $0x64] sm:$0xf]
    %v356 = vld [vmem:[#allocation7 + $0x68] sm:$0xf]
    %v357 = vld [vmem:[#allocation7 + $0x6c] sm:$0xf]
    %v358 = vld [vmem:[#allocation7 + $0x70] sm:$0xf]
    %v359 = vld [vmem:[#allocation7 + $0x74] sm:$0xf]
    %v360 = vld [vmem:[#allocation7 + $0x78] sm:$0xf]
    %v361 = vld [vmem:[#allocation7 + $0x7c] sm:$0xf]
    %v394 = vunpack.c.l.b16 %v330
    %v395 = vunpack.c.l.b16 %v331
    %v396 = vunpack.c.l.b16 %v332
    %v397 = vunpack.c.l.b16 %v333
    %v398 = vunpack.c.l.b16 %v334
    %v399 = vunpack.c.l.b16 %v335
    %v400 = vunpack.c.l.b16 %v336
    %v401 = vunpack.c.l.b16 %v337
    %v402 = vunpack.c.l.b16 %v338
    %v403 = vunpack.c.l.b16 %v339
    %v404 = vunpack.c.l.b16 %v340
    %v405 = vunpack.c.l.b16 %v341
    %v406 = vunpack.c.l.b16 %v342
    %v407 = vunpack.c.l.b16 %v343
    %v408 = vunpack.c.l.b16 %v344
    %v409 = vunpack.c.l.b16 %v345
    %v410 = vunpack.c.l.b16 %v346
    %v411 = vunpack.c.l.b16 %v347
    %v412 = vunpack.c.l.b16 %v348
    %v413 = vunpack.c.l.b16 %v349
    %v414 = vunpack.c.l.b16 %v350
    %v415 = vunpack.c.l.b16 %v351
    %v416 = vunpack.c.l.b16 %v352
    %v417 = vunpack.c.l.b16 %v353
    %v418 = vunpack.c.l.b16 %v354
    %v419 = vunpack.c.l.b16 %v355
    %v420 = vunpack.c.l.b16 %v356
    %v421 = vunpack.c.l.b16 %v357
    %v422 = vunpack.c.l.b16 %v358
    %v423 = vunpack.c.l.b16 %v359
    %v424 = vunpack.c.l.b16 %v360
    %v425 = vunpack.c.l.b16 %v361
    %v426 = vpack.c.b16 %v395, %v394
    %v427 = vpack.c.b16 %v397, %v396
    %v428 = vpack.c.b16 %v399, %v398
    %v429 = vpack.c.b16 %v401, %v400
    %v430 = vpack.c.b16 %v403, %v402
    %v431 = vpack.c.b16 %v405, %v404
    %v432 = vpack.c.b16 %v407, %v406
    %v433 = vpack.c.b16 %v409, %v408
    %v434 = vpack.c.b16 %v411, %v410
    %v435 = vpack.c.b16 %v413, %v412
    %v436 = vpack.c.b16 %v415, %v414
    %v437 = vpack.c.b16 %v417, %v416
    %v438 = vpack.c.b16 %v419, %v418
    %v439 = vpack.c.b16 %v421, %v420
    %v440 = vpack.c.b16 %v423, %v422
    %v441 = vpack.c.b16 %v425, %v424
    %458 = vmatprep.subr.bf16.mxu0 0
    %459 = vmatpush1.bf16.msra.mxu0 %v426
    %460 = vmatprep.subr.bf16.mxu0 0
    %461 = vmatpush1.bf16.msra.mxu0 %v427
    %462 = vmatprep.subr.bf16.mxu0 0
    %463 = vmatpush1.bf16.msra.mxu0 %v428
    %464 = vmatprep.subr.bf16.mxu0 0
    %465 = vmatpush1.bf16.msra.mxu0 %v429
    %466 = vmatprep.subr.bf16.mxu0 0
    %467 = vmatpush1.bf16.msra.mxu0 %v430
    %468 = vmatprep.subr.bf16.mxu0 0
    %469 = vmatpush1.bf16.msra.mxu0 %v431
    %470 = vmatprep.subr.bf16.mxu0 0
    %471 = vmatpush1.bf16.msra.mxu0 %v432
    %472 = vmatprep.subr.bf16.mxu0 0
    %473 = vmatpush1.bf16.msra.mxu0 %v433
    %474 = vmatprep.subr.bf16.mxu0 0
    %475 = vmatpush1.bf16.msra.mxu0 %v434
    %476 = vmatprep.subr.bf16.mxu0 0
    %477 = vmatpush1.bf16.msra.mxu0 %v435
    %478 = vmatprep.subr.bf16.mxu0 0
    %479 = vmatpush1.bf16.msra.mxu0 %v436
    %480 = vmatprep.subr.bf16.mxu0 0
    %481 = vmatpush1.bf16.msra.mxu0 %v437
    %482 = vmatprep.subr.bf16.mxu0 0
    %483 = vmatpush1.bf16.msra.mxu0 %v438
    %484 = vmatprep.subr.bf16.mxu0 0
    %485 = vmatpush1.bf16.msra.mxu0 %v439
    %486 = vmatprep.subr.bf16.mxu0 0
    %487 = vmatpush1.bf16.msra.mxu0 %v440
    %488 = vmatprep.subr.bf16.mxu0 0
    %489 = vmatpush1.bf16.msra.mxu0 %v441
    %490 = vmatprep.mubr.bf16.mxu0 %v161
    %491 = vmatmul.mubr.bf16.gmra.mrb[0].mxu0 %v160
    %v492 = vpop.f32.mrb[0].mxu0
    %v493 = vadd.f32 0.0, %v492
    %v494 = vpop.f32.mrb[0].mxu0
    %v495 = vpop.f32.mrb[0].mxu0
    %v496 = vpop.f32.mrb[0].mxu0
    %497 = vdwg.mxu0
    %v498 = vpack.c.bf16 %v325, %v325
    %v499 = vpack.c.bf16 %v493, %v493
    %v500 = vld [vmem:[%s2] sm:$0xf]
    %v501 = vld [vmem:[%s3] sm:$0xf]
    %vm502 = vcmask 31744
    %v504 = vsel %vm502, %v500, 0
    %vm506 = vcmask 1041408
    %v508 = vsel %vm506, %v498, 0
    %510 = vmatprep.subr.bf16.mxu0 0
    %511 = vmatpush1.bf16.msra.mxu0 %v508
    %512 = vmatprep.subr.bf16.mxu0 0
    %513 = vmatpush1.bf16.msra.mxu0 0
    %514 = vmatprep.subr.bf16.mxu0 0
    %515 = vmatpush1.bf16.msra.mxu0 0
    %516 = vmatprep.subr.bf16.mxu0 0
    %517 = vmatpush1.bf16.msra.mxu0 0
    %518 = vmatprep.subr.bf16.mxu0 0
    %519 = vmatpush1.bf16.msra.mxu0 0
    %520 = vmatprep.subr.bf16.mxu0 0
    %521 = vmatpush1.bf16.msra.mxu0 0
    %522 = vmatprep.subr.bf16.mxu0 0
    %523 = vmatpush1.bf16.msra.mxu0 0
    %524 = vmatprep.subr.bf16.mxu0 0
    %525 = vmatpush1.bf16.msra.mxu0 0
    %526 = vmatprep.subr.bf16.mxu0 0
    %527 = vmatpush1.bf16.msra.mxu0 0
    %528 = vmatprep.subr.bf16.mxu0 0
    %529 = vmatpush1.bf16.msra.mxu0 0
    %530 = vmatprep.subr.bf16.mxu0 0
    %531 = vmatpush1.bf16.msra.mxu0 0
    %532 = vmatprep.subr.bf16.mxu0 0
    %533 = vmatpush1.bf16.msra.mxu0 0
    %534 = vmatprep.subr.bf16.mxu0 0
    %535 = vmatpush1.bf16.msra.mxu0 0
    %536 = vmatprep.subr.bf16.mxu0 0
    %537 = vmatpush1.bf16.msra.mxu0 0
    %538 = vmatprep.subr.bf16.mxu0 0
    %539 = vmatpush1.bf16.msra.mxu0 0
    %540 = vmatprep.subr.bf16.mxu0 0
    %541 = vmatpush1.bf16.msra.mxu0 0
    %542 = vmatprep.mubr.bf16.mxu0 0
    %543 = vmatmul.mubr.bf16.gmra.mrb[0].mxu0 %v504
    %v544 = vpop.f32.mrb[0].mxu0
    %v545 = vadd.f32 0.0, %v544
    %v546 = vpop.f32.mrb[0].mxu0
    %v547 = vpop.f32.mrb[0].mxu0
    %v548 = vpop.f32.mrb[0].mxu0
    %549 = vdwg.mxu0
    %v551 = vsel %vm502, %v501, 0
    %v554 = vsel %vm506, %v499, 0
    %556 = vmatprep.subr.bf16.mxu0 0
    %557 = vmatpush1.bf16.msra.mxu0 %v554
    %558 = vmatprep.subr.bf16.mxu0 0
    %559 = vmatpush1.bf16.msra.mxu0 0
    %560 = vmatprep.subr.bf16.mxu0 0
    %561 = vmatpush1.bf16.msra.mxu0 0
    %562 = vmatprep.subr.bf16.mxu0 0
    %563 = vmatpush1.bf16.msra.mxu0 0
    %564 = vmatprep.subr.bf16.mxu0 0
    %565 = vmatpush1.bf16.msra.mxu0 0
    %566 = vmatprep.subr.bf16.mxu0 0
    %567 = vmatpush1.bf16.msra.mxu0 0
    %568 = vmatprep.subr.bf16.mxu0 0
    %569 = vmatpush1.bf16.msra.mxu0 0
    %570 = vmatprep.subr.bf16.mxu0 0
    %571 = vmatpush1.bf16.msra.mxu0 0
    %572 = vmatprep.subr.bf16.mxu0 0
    %573 = vmatpush1.bf16.msra.mxu0 0
    %574 = vmatprep.subr.bf16.mxu0 0
    %575 = vmatpush1.bf16.msra.mxu0 0
    %576 = vmatprep.subr.bf16.mxu0 0
    %577 = vmatpush1.bf16.msra.mxu0 0
    %578 = vmatprep.subr.bf16.mxu0 0
    %579 = vmatpush1.bf16.msra.mxu0 0
    %580 = vmatprep.subr.bf16.mxu0 0
    %581 = vmatpush1.bf16.msra.mxu0 0
    %582 = vmatprep.subr.bf16.mxu0 0
    %583 = vmatpush1.bf16.msra.mxu0 0
    %584 = vmatprep.subr.bf16.mxu0 0
    %585 = vmatpush1.bf16.msra.mxu0 0
    %586 = vmatprep.subr.bf16.mxu0 0
    %587 = vmatpush1.bf16.msra.mxu0 0
    %588 = vmatprep.mubr.bf16.mxu0 0
    %589 = vmatmul.mubr.bf16.gmra.mrb[0].mxu0 %v551
    %v590 = vpop.f32.mrb[0].mxu0
    %v591 = vadd.f32 0.0, %v590
    %v592 = vpop.f32.mrb[0].mxu0
    %v593 = vpop.f32.mrb[0].mxu0
    %v594 = vpop.f32.mrb[0].mxu0
    %595 = vdwg.mxu0
    %v596 = vsub.f32 %v545, %v591
    %597 = vmatprep.subr.bf16.mxu0 0
    %598 = vmatpush1.bf16.msra.mxu0 %v508
    %599 = vmatprep.subr.bf16.mxu0 0
    %600 = vmatpush1.bf16.msra.mxu0 0
    %601 = vmatprep.subr.bf16.mxu0 0
    %602 = vmatpush1.bf16.msra.mxu0 0
    %603 = vmatprep.subr.bf16.mxu0 0
    %604 = vmatpush1.bf16.msra.mxu0 0
    %605 = vmatprep.subr.bf16.mxu0 0
    %606 = vmatpush1.bf16.msra.mxu0 0
    %607 = vmatprep.subr.bf16.mxu0 0
    %608 = vmatpush1.bf16.msra.mxu0 0
    %609 = vmatprep.subr.bf16.mxu0 0
    %610 = vmatpush1.bf16.msra.mxu0 0
    %611 = vmatprep.subr.bf16.mxu0 0
    %612 = vmatpush1.bf16.msra.mxu0 0
    %613 = vmatprep.subr.bf16.mxu0 0
    %614 = vmatpush1.bf16.msra.mxu0 0
    %615 = vmatprep.subr.bf16.mxu0 0
    %616 = vmatpush1.bf16.msra.mxu0 0
    %617 = vmatprep.subr.bf16.mxu0 0
    %618 = vmatpush1.bf16.msra.mxu0 0
    %619 = vmatprep.subr.bf16.mxu0 0
    %620 = vmatpush1.bf16.msra.mxu0 0
    %621 = vmatprep.subr.bf16.mxu0 0
    %622 = vmatpush1.bf16.msra.mxu0 0
    %623 = vmatprep.subr.bf16.mxu0 0
    %624 = vmatpush1.bf16.msra.mxu0 0
    %625 = vmatprep.subr.bf16.mxu0 0
    %626 = vmatpush1.bf16.msra.mxu0 0
    %627 = vmatprep.subr.bf16.mxu0 0
    %628 = vmatpush1.bf16.msra.mxu0 0
    %629 = vmatprep.mubr.bf16.mxu0 0
    %630 = vmatmul.mubr.bf16.gmra.mrb[0].mxu0 %v551
    %v631 = vpop.f32.mrb[0].mxu0
    %v632 = vadd.f32 0.0, %v631
    %v633 = vpop.f32.mrb[0].mxu0
    %v634 = vpop.f32.mrb[0].mxu0
    %v635 = vpop.f32.mrb[0].mxu0
    %636 = vdwg.mxu0
    %637 = vmatprep.subr.bf16.mxu0 0
    %638 = vmatpush1.bf16.msra.mxu0 %v554
    %639 = vmatprep.subr.bf16.mxu0 0
    %640 = vmatpush1.bf16.msra.mxu0 0
    %641 = vmatprep.subr.bf16.mxu0 0
    %642 = vmatpush1.bf16.msra.mxu0 0
    %643 = vmatprep.subr.bf16.mxu0 0
    %644 = vmatpush1.bf16.msra.mxu0 0
    %645 = vmatprep.subr.bf16.mxu0 0
    %646 = vmatpush1.bf16.msra.mxu0 0
    %647 = vmatprep.subr.bf16.mxu0 0
    %648 = vmatpush1.bf16.msra.mxu0 0
    %649 = vmatprep.subr.bf16.mxu0 0
    %650 = vmatpush1.bf16.msra.mxu0 0
    %651 = vmatprep.subr.bf16.mxu0 0
    %652 = vmatpush1.bf16.msra.mxu0 0
    %653 = vmatprep.subr.bf16.mxu0 0
    %654 = vmatpush1.bf16.msra.mxu0 0
    %655 = vmatprep.subr.bf16.mxu0 0
    %656 = vmatpush1.bf16.msra.mxu0 0
    %657 = vmatprep.subr.bf16.mxu0 0
    %658 = vmatpush1.bf16.msra.mxu0 0
    %659 = vmatprep.subr.bf16.mxu0 0
    %660 = vmatpush1.bf16.msra.mxu0 0
    %661 = vmatprep.subr.bf16.mxu0 0
    %662 = vmatpush1.bf16.msra.mxu0 0
    %663 = vmatprep.subr.bf16.mxu0 0
    %664 = vmatpush1.bf16.msra.mxu0 0
    %665 = vmatprep.subr.bf16.mxu0 0
    %666 = vmatpush1.bf16.msra.mxu0 0
    %667 = vmatprep.subr.bf16.mxu0 0
    %668 = vmatpush1.bf16.msra.mxu0 0
    %669 = vmatprep.mubr.bf16.mxu0 0
    %670 = vmatmul.mubr.bf16.gmra.mrb[0].mxu0 %v504
    %v671 = vpop.f32.mrb[0].mxu0
    %v672 = vadd.f32 %v632, %v671
    %v673 = vpop.f32.mrb[0].mxu0
    %v674 = vpop.f32.mrb[0].mxu0
    %v675 = vpop.f32.mrb[0].mxu0
    %676 = vdwg.mxu0
    %v677 = vld [vmem:[%s6] sm:$0xff]
    %v678 = vld [vmem:[%s7] sm:$0xff]
    %v679 = vmul.f32 %v596, %v677
    %v680 = vmul.f32 %v672, %v678
    %v681 = vsub.f32 %v679, %v680
    %v682 = vmul.f32 %v596, %v678
    %v683 = vmul.f32 %v672, %v677
    %v684 = vadd.f32 %v682, %v683
    %v685 = vpack.c.bf16 %v681, %v681
    %v686 = vld [vmem:[#allocation8] sm:$0xff]
    %v687 = vld [vmem:[#allocation8 + $0x8] sm:$0xff]
    %v688 = vld [vmem:[#allocation8 + $0x10] sm:$0xff]
    %v689 = vld [vmem:[#allocation8 + $0x18] sm:$0xff]
    %v690 = vld [vmem:[#allocation8 + $0x20] sm:$0xff]
    %v691 = vld [vmem:[#allocation8 + $0x28] sm:$0xff]
    %v692 = vld [vmem:[#allocation8 + $0x30] sm:$0xff]
    %v693 = vld [vmem:[#allocation8 + $0x38] sm:$0xff]
    %v694 = vld [vmem:[#allocation8 + $0x40] sm:$0xff]
    %v695 = vld [vmem:[#allocation8 + $0x48] sm:$0xff]
    %v696 = vld [vmem:[#allocation8 + $0x50] sm:$0xff]
    %v697 = vld [vmem:[#allocation8 + $0x58] sm:$0xff]
    %v698 = vld [vmem:[#allocation8 + $0x60] sm:$0xff]
    %v699 = vld [vmem:[#allocation8 + $0x68] sm:$0xff]
    %v700 = vld [vmem:[#allocation8 + $0x70] sm:$0xff]
    %v701 = vld [vmem:[#allocation8 + $0x78] sm:$0xff]
    %v718 = vunpack.c.l.b16 %v686
    %v719 = vunpack.c.h.b16 %v686
    %v720 = vunpack.c.l.b16 %v687
    %v721 = vunpack.c.h.b16 %v687
    %v722 = vunpack.c.l.b16 %v688
    %v723 = vunpack.c.h.b16 %v688
    %v724 = vunpack.c.l.b16 %v689
    %v725 = vunpack.c.h.b16 %v689
    %v726 = vunpack.c.l.b16 %v690
    %v727 = vunpack.c.h.b16 %v690
    %v728 = vunpack.c.l.b16 %v691
    %v729 = vunpack.c.h.b16 %v691
    %v730 = vunpack.c.l.b16 %v692
    %v731 = vunpack.c.h.b16 %v692
    %v732 = vunpack.c.l.b16 %v693
    %v733 = vunpack.c.h.b16 %v693
    %v734 = vunpack.c.l.b16 %v694
    %v735 = vunpack.c.h.b16 %v694
    %v736 = vunpack.c.l.b16 %v695
    %v737 = vunpack.c.h.b16 %v695
    %v738 = vunpack.c.l.b16 %v696
    %v739 = vunpack.c.h.b16 %v696
    %v740 = vunpack.c.l.b16 %v697
    %v741 = vunpack.c.h.b16 %v697
    %v742 = vunpack.c.l.b16 %v698
    %v743 = vunpack.c.h.b16 %v698
    %v744 = vunpack.c.l.b16 %v699
    %v745 = vunpack.c.h.b16 %v699
    %v746 = vunpack.c.l.b16 %v700
    %v747 = vunpack.c.h.b16 %v700
    %v748 = vunpack.c.l.b16 %v701
    %v749 = vunpack.c.h.b16 %v701
    %v750 = vpack.c.b16 %v720, %v718
    %v751 = vpack.c.b16 %v721, %v719
    %v752 = vpack.c.b16 %v724, %v722
    %v753 = vpack.c.b16 %v725, %v723
    %v754 = vpack.c.b16 %v728, %v726
    %v755 = vpack.c.b16 %v729, %v727
    %v756 = vpack.c.b16 %v732, %v730
    %v757 = vpack.c.b16 %v733, %v731
    %v758 = vpack.c.b16 %v736, %v734
    %v759 = vpack.c.b16 %v737, %v735
    %v760 = vpack.c.b16 %v740, %v738
    %v761 = vpack.c.b16 %v741, %v739
    %v762 = vpack.c.b16 %v744, %v742
    %v763 = vpack.c.b16 %v745, %v743
    %v764 = vpack.c.b16 %v748, %v746
    %v765 = vpack.c.b16 %v749, %v747
    %782 = vmatprep.subr.bf16.mxu0 %v751
    %783 = vmatpush1.bf16.msra.mxu0 %v750
    %784 = vmatprep.subr.bf16.mxu0 %v753
    %785 = vmatpush1.bf16.msra.mxu0 %v752
    %786 = vmatprep.subr.bf16.mxu0 %v755
    %787 = vmatpush1.bf16.msra.mxu0 %v754
    %788 = vmatprep.subr.bf16.mxu0 %v757
    %789 = vmatpush1.bf16.msra.mxu0 %v756
    %790 = vmatprep.subr.bf16.mxu0 %v759
    %791 = vmatpush1.bf16.msra.mxu0 %v758
    %792 = vmatprep.subr.bf16.mxu0 %v761
    %793 = vmatpush1.bf16.msra.mxu0 %v760
    %794 = vmatprep.subr.bf16.mxu0 %v763
    %795 = vmatpush1.bf16.msra.mxu0 %v762
    %796 = vmatprep.subr.bf16.mxu0 %v765
    %797 = vmatpush1.bf16.msra.mxu0 %v764
    %798 = vmatprep.subr.bf16.mxu0 0
    %799 = vmatpush1.bf16.msra.mxu0 0
    %800 = vmatprep.subr.bf16.mxu0 0
    %801 = vmatpush1.bf16.msra.mxu0 0
    %802 = vmatprep.subr.bf16.mxu0 0
    %803 = vmatpush1.bf16.msra.mxu0 0
    %804 = vmatprep.subr.bf16.mxu0 0
    %805 = vmatpush1.bf16.msra.mxu0 0
    %806 = vmatprep.subr.bf16.mxu0 0
    %807 = vmatpush1.bf16.msra.mxu0 0
    %808 = vmatprep.subr.bf16.mxu0 0
    %809 = vmatpush1.bf16.msra.mxu0 0
    %810 = vmatprep.subr.bf16.mxu0 0
    %811 = vmatpush1.bf16.msra.mxu0 0
    %812 = vmatprep.subr.bf16.mxu0 0
    %813 = vmatpush1.bf16.msra.mxu0 0
    %814 = vmatprep.mubr.bf16.mxu0 0
    %815 = vmatmul.mubr.bf16.gmra.mrb[0].mxu0 %v685
    %v816 = vpop.f32.mrb[0].mxu0
    %v817 = vadd.f32 0.0, %v816
    %v818 = vpop.f32.mrb[0].mxu0
    %v819 = vadd.f32 0.0, %v818
    %v820 = vpop.f32.mrb[0].mxu0
    %v821 = vpop.f32.mrb[0].mxu0
    %822 = vdwg.mxu0
    %v823 = vpack.c.bf16 %v684, %v684
    %v824 = vld [vmem:[#allocation10] sm:$0xff]
    %v825 = vld [vmem:[#allocation10 + $0x8] sm:$0xff]
    %v826 = vld [vmem:[#allocation10 + $0x10] sm:$0xff]
    %v827 = vld [vmem:[#allocation10 + $0x18] sm:$0xff]
    %v828 = vld [vmem:[#allocation10 + $0x20] sm:$0xff]
    %v829 = vld [vmem:[#allocation10 + $0x28] sm:$0xff]
    %v830 = vld [vmem:[#allocation10 + $0x30] sm:$0xff]
    %v831 = vld [vmem:[#allocation10 + $0x38] sm:$0xff]
    %v832 = vld [vmem:[#allocation10 + $0x40] sm:$0xff]
    %v833 = vld [vmem:[#allocation10 + $0x48] sm:$0xff]
    %v834 = vld [vmem:[#allocation10 + $0x50] sm:$0xff]
    %v835 = vld [vmem:[#allocation10 + $0x58] sm:$0xff]
    %v836 = vld [vmem:[#allocation10 + $0x60] sm:$0xff]
    %v837 = vld [vmem:[#allocation10 + $0x68] sm:$0xff]
    %v838 = vld [vmem:[#allocation10 + $0x70] sm:$0xff]
    %v839 = vld [vmem:[#allocation10 + $0x78] sm:$0xff]
    %v856 = vunpack.c.l.b16 %v824
    %v857 = vunpack.c.h.b16 %v824
    %v858 = vunpack.c.l.b16 %v825
    %v859 = vunpack.c.h.b16 %v825
    %v860 = vunpack.c.l.b16 %v826
    %v861 = vunpack.c.h.b16 %v826
    %v862 = vunpack.c.l.b16 %v827
    %v863 = vunpack.c.h.b16 %v827
    %v864 = vunpack.c.l.b16 %v828
    %v865 = vunpack.c.h.b16 %v828
    %v866 = vunpack.c.l.b16 %v829
    %v867 = vunpack.c.h.b16 %v829
    %v868 = vunpack.c.l.b16 %v830
    %v869 = vunpack.c.h.b16 %v830
    %v870 = vunpack.c.l.b16 %v831
    %v871 = vunpack.c.h.b16 %v831
    %v872 = vunpack.c.l.b16 %v832
    %v873 = vunpack.c.h.b16 %v832
    %v874 = vunpack.c.l.b16 %v833
    %v875 = vunpack.c.h.b16 %v833
    %v876 = vunpack.c.l.b16 %v834
    %v877 = vunpack.c.h.b16 %v834
    %v878 = vunpack.c.l.b16 %v835
    %v879 = vunpack.c.h.b16 %v835
    %v880 = vunpack.c.l.b16 %v836
    %v881 = vunpack.c.h.b16 %v836
    %v882 = vunpack.c.l.b16 %v837
    %v883 = vunpack.c.h.b16 %v837
    %v884 = vunpack.c.l.b16 %v838
    %v885 = vunpack.c.h.b16 %v838
    %v886 = vunpack.c.l.b16 %v839
    %v887 = vunpack.c.h.b16 %v839
    %v888 = vpack.c.b16 %v858, %v856
    %v889 = vpack.c.b16 %v859, %v857
    %v890 = vpack.c.b16 %v862, %v860
    %v891 = vpack.c.b16 %v863, %v861
    %v892 = vpack.c.b16 %v866, %v864
    %v893 = vpack.c.b16 %v867, %v865
    %v894 = vpack.c.b16 %v870, %v868
    %v895 = vpack.c.b16 %v871, %v869
    %v896 = vpack.c.b16 %v874, %v872
    %v897 = vpack.c.b16 %v875, %v873
    %v898 = vpack.c.b16 %v878, %v876
    %v899 = vpack.c.b16 %v879, %v877
    %v900 = vpack.c.b16 %v882, %v880
    %v901 = vpack.c.b16 %v883, %v881
    %v902 = vpack.c.b16 %v886, %v884
    %v903 = vpack.c.b16 %v887, %v885
    %920 = vmatprep.subr.bf16.mxu0 %v889
    %921 = vmatpush1.bf16.msra.mxu0 %v888
    %922 = vmatprep.subr.bf16.mxu0 %v891
    %923 = vmatpush1.bf16.msra.mxu0 %v890
    %924 = vmatprep.subr.bf16.mxu0 %v893
    %925 = vmatpush1.bf16.msra.mxu0 %v892
    %926 = vmatprep.subr.bf16.mxu0 %v895
    %927 = vmatpush1.bf16.msra.mxu0 %v894
    %928 = vmatprep.subr.bf16.mxu0 %v897
    %929 = vmatpush1.bf16.msra.mxu0 %v896
    %930 = vmatprep.subr.bf16.mxu0 %v899
    %931 = vmatpush1.bf16.msra.mxu0 %v898
    %932 = vmatprep.subr.bf16.mxu0 %v901
    %933 = vmatpush1.bf16.msra.mxu0 %v900
    %934 = vmatprep.subr.bf16.mxu0 %v903
    %935 = vmatpush1.bf16.msra.mxu0 %v902
    %936 = vmatprep.subr.bf16.mxu0 0
    %937 = vmatpush1.bf16.msra.mxu0 0
    %938 = vmatprep.subr.bf16.mxu0 0
    %939 = vmatpush1.bf16.msra.mxu0 0
    %940 = vmatprep.subr.bf16.mxu0 0
    %941 = vmatpush1.bf16.msra.mxu0 0
    %942 = vmatprep.subr.bf16.mxu0 0
    %943 = vmatpush1.bf16.msra.mxu0 0
    %944 = vmatprep.subr.bf16.mxu0 0
    %945 = vmatpush1.bf16.msra.mxu0 0
    %946 = vmatprep.subr.bf16.mxu0 0
    %947 = vmatpush1.bf16.msra.mxu0 0
    %948 = vmatprep.subr.bf16.mxu0 0
    %949 = vmatpush1.bf16.msra.mxu0 0
    %950 = vmatprep.subr.bf16.mxu0 0
    %951 = vmatpush1.bf16.msra.mxu0 0
    %952 = vmatprep.mubr.bf16.mxu0 0
    %953 = vmatmul.mubr.bf16.gmra.mrb[0].mxu0 %v823
    %v954 = vpop.f32.mrb[0].mxu0
    %v955 = vadd.f32 0.0, %v954
    %v956 = vpop.f32.mrb[0].mxu0
    %v957 = vadd.f32 0.0, %v956
    %v958 = vpop.f32.mrb[0].mxu0
    %v959 = vpop.f32.mrb[0].mxu0
    %960 = vdwg.mxu0
    %v961 = vsub.f32 %v817, %v955
    %v962 = vsub.f32 %v819, %v957
    %963 = vst [vmem:[#allocation11] sm:$0xff] %v961
    %964 = vst [vmem:[#allocation11 + $0x8] sm:$0xff] %v962
    // Predicated region
    $region62: #{tpu_custom_call.1} parent=1 // pred_check
      _
    $region63: #{tpu_custom_call.1} parent=1 // pred_check_branch
      %966 = sbr.rel (0) target = $region65
    $region64: #{tpu_custom_call.1} parent=1 // pred_region
      %s968 = ssub.s32 256, 256
      %969 = vsyncadd [#allocation4], %s968
      %s971 = sshll.u32 [#allocation11], 4
      %s972 = int_to_ptr.vmem [resolvable:$true] %s971
      %974 = dma.vmem_to_hbm [thread:$0]  %s972, 256, %s10, [#allocation4]
    $region65: #{tpu_custom_call.1} parent=1 // pred_fallthru
      _
    // Predicated region
    $region66: #{tpu_custom_call.1} parent=1 // pred_check
      _
    $region67: #{tpu_custom_call.1} parent=1 // pred_check_branch
      %976 = sbr.rel (0) target = $region69
    $region68: #{tpu_custom_call.1} parent=1 // pred_region
      %977 = dma.done [#allocation4], 256
    $region69: #{tpu_custom_call.1} parent=1 // pred_fallthru
      _
    %978 = vsyncpa [#allocation3], 1
    %979 = vsyncpa [#allocation6], 1
    %980 = vsyncpa [#allocation9], 1
    %981 = vsyncpa [#allocation4], 1

</llo_original>
